<compile_context>
chip_gen: v5e
topology: v5e:2x2
jax: 0.10.0
libtpu: 0.0.40
codegen_flags: <defaults>
</compile_context>

<pallas_src>
import numpy as np
import jax
import jax.numpy as jnp
from jax import lax
from jax.experimental import pallas as pl
from jax.experimental.pallas import tpu as pltpu

_LANES = 128
_SUBLANES = 8


def _round_up(x, m):
    return (x + m - 1) // m * m


def _vmem_budgets():
    """Generation-aware (vmem_limit_bytes, f32 conv-slab byte budget)."""
    try:
        cap = pltpu.get_tpu_info().vmem_capacity_bytes
    except Exception:
        cap = 64 * 1024 * 1024
    if cap >= 96 * 1024 * 1024:                 # v5e / v6e: 128 MiB VMEM per core
        return 64 * 1024 * 1024, 2 * 1024 * 1024
    return 32 * 1024 * 1024, 768 * 1024         # v7x: 64 MiB VMEM per core


def _pick_row_tile(ho, wp, cout_p, budget):
    """Largest divisor of `ho` whose f32 conv-result slab (2*th_o*wp*cout_p*4B) fits the
    budget, preferring >= 2 row slabs so the grid has pipeline depth."""
    divs = [d for d in range(1, ho + 1) if ho % d == 0]
    fits = [d for d in divs if 2 * d * wp * cout_p * 4 <= budget] or [1]
    th = max(fits)
    if th == ho and ho > 1:
        smaller = [d for d in fits if d < ho]
        if smaller:
            th = max(smaller)
    return th


def _conv_bn_relu_pool_kernel(x_ref, w_ref, scale_ref, shift_ref, o_ref):
    # x_ref:     (1, H+2, Wp, Cin_p)      bf16 zero-padded image (resident across row slabs)
    # w_ref:     (9, Cin_p, Cout_p)       bf16 conv taps, tap index = ky*3 + kx
    # scale_ref: (1, Cout_p)              f32 fused BN scale
    # shift_ref: (1, Cout_p)              f32 fused BN shift (includes conv bias)
    # o_ref:     (1, TH_o, W_out, Cout_p) f32; valid data lives in even columns < W
    r = pl.program_id(1)

    th_o = o_ref.shape[1]
    th = 2 * th_o                      # conv rows produced by this slab
    wp = x_ref.shape[2]
    cin_p = x_ref.shape[3]
    cout_p = o_ref.shape[3]
    w_out = o_ref.shape[2]
    m = th * wp                        # flattened (row, col) extent of the conv result
    m2 = (th + 2) * wp                 # flattened extent of the input slab (with halo)

    # Row slab [r*th, r*th + th + 2) of the padded image (2-row halo for the 3x3 conv).
    row0 = pl.multiple_of(r * th, 2)
    xs = x_ref[0, pl.ds(row0, th + 2), :, :]             # (th+2, wp, cin_p) bf16
    x2 = xs.reshape(m2, cin_p).astype(jnp.float32)       # layout-preserving: wp % 8 == 0

    # kx shift realized on the narrow input slab (2 sublane rolls over (m2, cin_p) f32 on
    # the XLU) instead of rolling the (m, 128) f32 matmul results. Cross-row / wrapped
    # values land only in discarded pad columns >= W.
    slabs = (x2,
             pltpu.roll(x2, shift=m2 - 1, axis=0),
             pltpu.roll(x2, shift=m2 - 2, axis=0))

    # 3x3 conv: 9 back-to-back accumulating MXU dots (N = Cout_p lanes). Each ky tap is an
    # aligned (multiple-of-8) sublane slice of the (possibly kx-rolled) flat slab.
    lhs_taps = [slabs[kx][ky * wp:ky * wp + m, :].astype(jnp.bfloat16)
                for ky in range(3) for kx in range(3)]
    acc = jnp.zeros((m, cout_p), jnp.float32)
    for t in range(9):
        acc = acc + jnp.dot(lhs_taps[t], w_ref[t],
                            preferred_element_type=jnp.float32)

    # Fused BatchNorm (eval) + conv bias, then ReLU (f32).
    y = jnp.maximum(acc * scale_ref[0] + shift_ref[0], 0.0)

    # MaxPool2d(2, 2):
    #   width pairs via a single sublane roll + max on the flat layout (even cols valid),
    #   row pairs via a layout-preserving major-axis reshape + max.
    yw = jnp.maximum(y, pltpu.roll(y, shift=m - 1, axis=0))
    y4 = yw.reshape(th_o, 2, wp, cout_p)
    pooled = jnp.maximum(y4[:, 0], y4[:, 1])              # (th_o, wp, cout_p)

    # Store only the first w_out (<= wp) columns: trims padded-width HBM writeback while
    # keeping the store lane-dense (cout_p = 128) and sublane-aligned (w_out % 8 == 0).
    o_ref[...] = pooled[:, :w_out, :].reshape(1, th_o, w_out, cout_p).astype(o_ref.dtype)


def conv_with_pooling_to_half_size(x_nchw, weight, bias, gamma, beta,
                                   running_mean, running_var, eps=1e-5):
    """x_nchw: (N, Cin, H, W) f32. weight: (Cout, Cin, 3, 3). Returns (N, Cout, H//2, W//2) f32."""
    N, Cin, H, W = x_nchw.shape
    Cout = weight.shape[0]
    assert H % 2 == 0 and W % 2 == 0
    Ho, Wo = H // 2, W // 2

    cin_p = _round_up(Cin, _SUBLANES)
    cout_p = _round_up(Cout, _LANES)       # lane-dense matmul N dim + unmasked output stores
    wp = _round_up(W + 2, _SUBLANES)       # padded width: conv halo + sublane alignment
    hp = H + 2
    w_out = _round_up(2 * Wo, _SUBLANES)   # stored output width (<= wp)

    # NCHW -> NHWC (bf16) + zero pad (halo, width alignment, channels); XLA fuses these into
    # a single pass over the activations.
    x_nhwc = jnp.transpose(x_nchw, (0, 2, 3, 1)).astype(jnp.bfloat16)
    x_pad = jnp.pad(x_nhwc, ((0, 0), (1, 1), (1, wp - (W + 1)), (0, cin_p - Cin)))

    # (Cout, Cin, 3, 3) -> tap-major (9, Cin_p, Cout_p) bf16.
    w_hwio = jnp.transpose(weight, (2, 3, 1, 0))
    w_hwio = jnp.pad(w_hwio, ((0, 0), (0, 0), (0, cin_p - Cin), (0, cout_p - Cout)))
    w_taps = w_hwio.reshape(9, cin_p, cout_p).astype(jnp.bfloat16)

    # Fold BN (eval) + conv bias into per-channel scale/shift (kept in f32).
    scale = gamma / jnp.sqrt(running_var + eps)
    shift = (bias - running_mean) * scale + beta
    scale_p = jnp.pad(scale, (0, cout_p - Cout)).reshape(1, cout_p).astype(jnp.float32)
    shift_p = jnp.pad(shift, (0, cout_p - Cout)).reshape(1, cout_p).astype(jnp.float32)

    vmem_limit, slab_budget = _vmem_budgets()
    th_o = _pick_row_tile(Ho, wp, cout_p, slab_budget)
    grid = (N, Ho // th_o)

    out_full = pl.pallas_call(
        _conv_bn_relu_pool_kernel,
        out_shape=jax.ShapeDtypeStruct((N, Ho, w_out, cout_p), jnp.float32),
        grid_spec=pltpu.PrefetchScalarGridSpec(
            num_scalar_prefetch=0,
            grid=grid,
            in_specs=[
                pl.BlockSpec((1, hp, wp, cin_p), lambda n, r: (n, 0, 0, 0)),
                pl.BlockSpec((9, cin_p, cout_p), lambda n, r: (0, 0, 0)),
                pl.BlockSpec((1, cout_p), lambda n, r: (0, 0)),
                pl.BlockSpec((1, cout_p), lambda n, r: (0, 0)),
            ],
            out_specs=pl.BlockSpec((1, th_o, w_out, cout_p), lambda n, r: (n, r, 0, 0)),
        ),
        compiler_params=pltpu.CompilerParams(
            # Batch is the megacore axis: sharding the row-slab axis on v7x would duplicate
            # the resident-image DMA on both TensorCores.
            dimension_semantics=("parallel", "arbitrary"),
            vmem_limit_bytes=vmem_limit,
        ),
    )(x_pad, w_taps, scale_p, shift_p)

    # Keep the even pooled columns / real channels, back to NCHW (single fused XLA pass).
    out = out_full[:, :, 0:2 * Wo:2, :Cout]
    return jnp.transpose(out, (0, 3, 1, 2))


def _reference(x_nchw, weight, bias, gamma, beta, running_mean, running_var, eps=1e-5):
    """Pure-JAX reference of the same forward pass."""
    y = lax.conv_general_dilated(
        x_nchw, weight, window_strides=(1, 1), padding=((1, 1), (1, 1)),
        dimension_numbers=("NCHW", "OIHW", "NCHW"),
        precision=lax.Precision.HIGHEST,
    ) + bias[None, :, None, None]
    scale = gamma / jnp.sqrt(running_var + eps)
    y = (y - running_mean[None, :, None, None]) * scale[None, :, None, None] \
        + beta[None, :, None, None]
    y = jnp.maximum(y, 0.0)
    n, c, h, w = y.shape
    return jnp.max(y.reshape(n, c, h // 2, 2, w // 2, 2), axis=(3, 5))


if __name__ == "__main__":
    key = jax.random.PRNGKey(0)
    k_x, k_w, k_b, k_g, k_be, k_m, k_v = jax.random.split(key, 7)

    N, Cin, H, W = 2, 4, 16, 16
    Cout = 8

    x = jax.random.normal(k_x, (N, Cin, H, W), dtype=jnp.float32)
    weight = jax.random.normal(k_w, (Cout, Cin, 3, 3), dtype=jnp.float32) * 0.1
    bias = jax.random.normal(k_b, (Cout,), dtype=jnp.float32) * 0.1
    gamma = 1.0 + 0.1 * jax.random.normal(k_g, (Cout,), dtype=jnp.float32)
    beta = 0.1 * jax.random.normal(k_be, (Cout,), dtype=jnp.float32)
    running_mean = 0.1 * jax.random.normal(k_m, (Cout,), dtype=jnp.float32)
    running_var = 1.0 + 0.1 * jnp.abs(jax.random.normal(k_v, (Cout,), dtype=jnp.float32))

    out = conv_with_pooling_to_half_size(
        x, weight, bias, gamma, beta, running_mean, running_var
    )
    out = jax.block_until_ready(out)

    # The kernel feeds the MXU bf16 activations/weights (f32 accumulation); compare against an
    # f32 reference computed from the same bf16-rounded operands.
    x_q = x.astype(jnp.bfloat16).astype(jnp.float32)
    w_q = weight.astype(jnp.bfloat16).astype(jnp.float32)
    ref = _reference(x_q, w_q, bias, gamma, beta, running_mean, running_var)
    np.testing.assert_allclose(np.asarray(out), np.asarray(ref), rtol=1e-4, atol=1e-4)

    assert out.shape == (N, Cout, H // 2, W // 2)
    print("KERNEL_OK")
</pallas_src>

<mosaic_0001>
module attributes {stable_mosaic.version = 11 : i64} {
  func.func @_conv_bn_relu_pool_kernel(%arg0: i32, %arg1: i32, %arg2: memref<1x18x24x8xbf16, #tpu.memory_space<vmem>>, %arg3: memref<9x8x128xbf16, #tpu.memory_space<vmem>>, %arg4: memref<1x128xf32, #tpu.memory_space<vmem>>, %arg5: memref<1x128xf32, #tpu.memory_space<vmem>>, %arg6: memref<1x4x16x128xf32, #tpu.memory_space<vmem>>) attributes {dimension_semantics = [#tpu.dimension_semantics<parallel>, #tpu.dimension_semantics<arbitrary>], iteration_bounds = array<i64: 2, 2>, scalar_prefetch = 0 : i64, scratch_operands = 0 : i64, tpu.core_type = #tpu.core_type<tc>, window_params = [{transform_indices = @transform_0, window_bounds = array<i64: 1, 18, 24, 8>}, {pipeline_mode = #tpu.pipeline_mode<synchronous>, transform_indices = @transform_1, window_bounds = array<i64: 9, 8, 128>}, {pipeline_mode = #tpu.pipeline_mode<synchronous>, transform_indices = @transform_2, window_bounds = array<i64: 1, 128>}, {pipeline_mode = #tpu.pipeline_mode<synchronous>, transform_indices = @transform_3, window_bounds = array<i64: 1, 128>}, {transform_indices = @transform_4, window_bounds = array<i64: 1, 4, 16, 128>}]} {
    %c8_i32 = arith.constant 8 : i32
    %0 = arith.muli %arg1, %c8_i32 : i32
    %1 = tpu.assume_multiple %0, 2 : i32
    %c0 = arith.constant 0 : index
    %2 = arith.index_cast %1 : i32 to index
    %c0_0 = arith.constant 0 : index
    %c0_1 = arith.constant 0 : index
    %3 = vector.load %arg2[%c0, %2, %c0_0, %c0_1] : memref<1x18x24x8xbf16, #tpu.memory_space<vmem>>, vector<1x10x24x8xbf16>
    %4 = vector.shape_cast %3 : vector<1x10x24x8xbf16> to vector<10x24x8xbf16>
    %5 = vector.shape_cast %4 : vector<10x24x8xbf16> to vector<240x8xbf16>
    %6 = arith.extf %5 : vector<240x8xbf16> to vector<240x8xf32>
    %c239_i32 = arith.constant 239 : i32
    %7 = tpu.dynamic_rotate %6 by %c239_i32 dim 0 : vector<240x8xf32>, i32 -> vector<240x8xf32>
    %c238_i32 = arith.constant 238 : i32
    %8 = tpu.dynamic_rotate %6 by %c238_i32 dim 0 : vector<240x8xf32>, i32 -> vector<240x8xf32>
    %9 = vector.extract_strided_slice %6 {offsets = [0, 0], sizes = [192, 8], strides = [1, 1]} : vector<240x8xf32> to vector<192x8xf32>
    %10 = arith.truncf %9 : vector<192x8xf32> to vector<192x8xbf16>
    %11 = vector.extract_strided_slice %7 {offsets = [0, 0], sizes = [192, 8], strides = [1, 1]} : vector<240x8xf32> to vector<192x8xf32>
    %12 = arith.truncf %11 : vector<192x8xf32> to vector<192x8xbf16>
    %13 = vector.extract_strided_slice %8 {offsets = [0, 0], sizes = [192, 8], strides = [1, 1]} : vector<240x8xf32> to vector<192x8xf32>
    %14 = arith.truncf %13 : vector<192x8xf32> to vector<192x8xbf16>
    %15 = vector.extract_strided_slice %6 {offsets = [24, 0], sizes = [192, 8], strides = [1, 1]} : vector<240x8xf32> to vector<192x8xf32>
    %16 = arith.truncf %15 : vector<192x8xf32> to vector<192x8xbf16>
    %17 = vector.extract_strided_slice %7 {offsets = [24, 0], sizes = [192, 8], strides = [1, 1]} : vector<240x8xf32> to vector<192x8xf32>
    %18 = arith.truncf %17 : vector<192x8xf32> to vector<192x8xbf16>
    %19 = vector.extract_strided_slice %8 {offsets = [24, 0], sizes = [192, 8], strides = [1, 1]} : vector<240x8xf32> to vector<192x8xf32>
    %20 = arith.truncf %19 : vector<192x8xf32> to vector<192x8xbf16>
    %21 = vector.extract_strided_slice %6 {offsets = [48, 0], sizes = [192, 8], strides = [1, 1]} : vector<240x8xf32> to vector<192x8xf32>
    %22 = arith.truncf %21 : vector<192x8xf32> to vector<192x8xbf16>
    %23 = vector.extract_strided_slice %7 {offsets = [48, 0], sizes = [192, 8], strides = [1, 1]} : vector<240x8xf32> to vector<192x8xf32>
    %24 = arith.truncf %23 : vector<192x8xf32> to vector<192x8xbf16>
    %25 = vector.extract_strided_slice %8 {offsets = [48, 0], sizes = [192, 8], strides = [1, 1]} : vector<240x8xf32> to vector<192x8xf32>
    %26 = arith.truncf %25 : vector<192x8xf32> to vector<192x8xbf16>
    %cst = arith.constant 0.000000e+00 : f32
    %27 = vector.broadcast %cst : f32 to vector<192x128xf32>
    %c0_2 = arith.constant 0 : index
    %c0_3 = arith.constant 0 : index
    %c0_4 = arith.constant 0 : index
    %28 = vector.load %arg3[%c0_2, %c0_3, %c0_4] : memref<9x8x128xbf16, #tpu.memory_space<vmem>>, vector<1x8x128xbf16>
    %29 = vector.shape_cast %28 : vector<1x8x128xbf16> to vector<8x128xbf16>
    %cst_5 = arith.constant dense<0.000000e+00> : vector<192x128xf32>
    %30 = tpu.matmul %10, %29, %cst_5 {dimension_numbers = #tpu.dot_dimension_numbers<[1], [0], [0], [1], [0, 0, 1, 1], [], []>} : vector<192x8xbf16>, vector<8x128xbf16>, vector<192x128xf32> -> vector<192x128xf32>
    %31 = arith.addf %27, %30 : vector<192x128xf32>
    %c1 = arith.constant 1 : index
    %c0_6 = arith.constant 0 : index
    %c0_7 = arith.constant 0 : index
    %32 = vector.load %arg3[%c1, %c0_6, %c0_7] : memref<9x8x128xbf16, #tpu.memory_space<vmem>>, vector<1x8x128xbf16>
    %33 = vector.shape_cast %32 : vector<1x8x128xbf16> to vector<8x128xbf16>
    %cst_8 = arith.constant dense<0.000000e+00> : vector<192x128xf32>
    %34 = tpu.matmul %12, %33, %cst_8 {dimension_numbers = #tpu.dot_dimension_numbers<[1], [0], [0], [1], [0, 0, 1, 1], [], []>} : vector<192x8xbf16>, vector<8x128xbf16>, vector<192x128xf32> -> vector<192x128xf32>
    %35 = arith.addf %31, %34 : vector<192x128xf32>
    %c2 = arith.constant 2 : index
    %c0_9 = arith.constant 0 : index
    %c0_10 = arith.constant 0 : index
    %36 = vector.load %arg3[%c2, %c0_9, %c0_10] : memref<9x8x128xbf16, #tpu.memory_space<vmem>>, vector<1x8x128xbf16>
    %37 = vector.shape_cast %36 : vector<1x8x128xbf16> to vector<8x128xbf16>
    %cst_11 = arith.constant dense<0.000000e+00> : vector<192x128xf32>
    %38 = tpu.matmul %14, %37, %cst_11 {dimension_numbers = #tpu.dot_dimension_numbers<[1], [0], [0], [1], [0, 0, 1, 1], [], []>} : vector<192x8xbf16>, vector<8x128xbf16>, vector<192x128xf32> -> vector<192x128xf32>
    %39 = arith.addf %35, %38 : vector<192x128xf32>
    %c3 = arith.constant 3 : index
    %c0_12 = arith.constant 0 : index
    %c0_13 = arith.constant 0 : index
    %40 = vector.load %arg3[%c3, %c0_12, %c0_13] : memref<9x8x128xbf16, #tpu.memory_space<vmem>>, vector<1x8x128xbf16>
    %41 = vector.shape_cast %40 : vector<1x8x128xbf16> to vector<8x128xbf16>
    %cst_14 = arith.constant dense<0.000000e+00> : vector<192x128xf32>
    %42 = tpu.matmul %16, %41, %cst_14 {dimension_numbers = #tpu.dot_dimension_numbers<[1], [0], [0], [1], [0, 0, 1, 1], [], []>} : vector<192x8xbf16>, vector<8x128xbf16>, vector<192x128xf32> -> vector<192x128xf32>
    %43 = arith.addf %39, %42 : vector<192x128xf32>
    %c4 = arith.constant 4 : index
    %c0_15 = arith.constant 0 : index
    %c0_16 = arith.constant 0 : index
    %44 = vector.load %arg3[%c4, %c0_15, %c0_16] : memref<9x8x128xbf16, #tpu.memory_space<vmem>>, vector<1x8x128xbf16>
    %45 = vector.shape_cast %44 : vector<1x8x128xbf16> to vector<8x128xbf16>
    %cst_17 = arith.constant dense<0.000000e+00> : vector<192x128xf32>
    %46 = tpu.matmul %18, %45, %cst_17 {dimension_numbers = #tpu.dot_dimension_numbers<[1], [0], [0], [1], [0, 0, 1, 1], [], []>} : vector<192x8xbf16>, vector<8x128xbf16>, vector<192x128xf32> -> vector<192x128xf32>
    %47 = arith.addf %43, %46 : vector<192x128xf32>
    %c5 = arith.constant 5 : index
    %c0_18 = arith.constant 0 : index
    %c0_19 = arith.constant 0 : index
    %48 = vector.load %arg3[%c5, %c0_18, %c0_19] : memref<9x8x128xbf16, #tpu.memory_space<vmem>>, vector<1x8x128xbf16>
    %49 = vector.shape_cast %48 : vector<1x8x128xbf16> to vector<8x128xbf16>
    %cst_20 = arith.constant dense<0.000000e+00> : vector<192x128xf32>
    %50 = tpu.matmul %20, %49, %cst_20 {dimension_numbers = #tpu.dot_dimension_numbers<[1], [0], [0], [1], [0, 0, 1, 1], [], []>} : vector<192x8xbf16>, vector<8x128xbf16>, vector<192x128xf32> -> vector<192x128xf32>
    %51 = arith.addf %47, %50 : vector<192x128xf32>
    %c6 = arith.constant 6 : index
    %c0_21 = arith.constant 0 : index
    %c0_22 = arith.constant 0 : index
    %52 = vector.load %arg3[%c6, %c0_21, %c0_22] : memref<9x8x128xbf16, #tpu.memory_space<vmem>>, vector<1x8x128xbf16>
    %53 = vector.shape_cast %52 : vector<1x8x128xbf16> to vector<8x128xbf16>
    %cst_23 = arith.constant dense<0.000000e+00> : vector<192x128xf32>
    %54 = tpu.matmul %22, %53, %cst_23 {dimension_numbers = #tpu.dot_dimension_numbers<[1], [0], [0], [1], [0, 0, 1, 1], [], []>} : vector<192x8xbf16>, vector<8x128xbf16>, vector<192x128xf32> -> vector<192x128xf32>
    %55 = arith.addf %51, %54 : vector<192x128xf32>
    %c7 = arith.constant 7 : index
    %c0_24 = arith.constant 0 : index
    %c0_25 = arith.constant 0 : index
    %56 = vector.load %arg3[%c7, %c0_24, %c0_25] : memref<9x8x128xbf16, #tpu.memory_space<vmem>>, vector<1x8x128xbf16>
    %57 = vector.shape_cast %56 : vector<1x8x128xbf16> to vector<8x128xbf16>
    %cst_26 = arith.constant dense<0.000000e+00> : vector<192x128xf32>
    %58 = tpu.matmul %24, %57, %cst_26 {dimension_numbers = #tpu.dot_dimension_numbers<[1], [0], [0], [1], [0, 0, 1, 1], [], []>} : vector<192x8xbf16>, vector<8x128xbf16>, vector<192x128xf32> -> vector<192x128xf32>
    %59 = arith.addf %55, %58 : vector<192x128xf32>
    %c8 = arith.constant 8 : index
    %c0_27 = arith.constant 0 : index
    %c0_28 = arith.constant 0 : index
    %60 = vector.load %arg3[%c8, %c0_27, %c0_28] : memref<9x8x128xbf16, #tpu.memory_space<vmem>>, vector<1x8x128xbf16>
    %61 = vector.shape_cast %60 : vector<1x8x128xbf16> to vector<8x128xbf16>
    %cst_29 = arith.constant dense<0.000000e+00> : vector<192x128xf32>
    %62 = tpu.matmul %26, %61, %cst_29 {dimension_numbers = #tpu.dot_dimension_numbers<[1], [0], [0], [1], [0, 0, 1, 1], [], []>} : vector<192x8xbf16>, vector<8x128xbf16>, vector<192x128xf32> -> vector<192x128xf32>
    %63 = arith.addf %59, %62 : vector<192x128xf32>
    %c0_30 = arith.constant 0 : index
    %c0_31 = arith.constant 0 : index
    %64 = vector.load %arg4[%c0_30, %c0_31] : memref<1x128xf32, #tpu.memory_space<vmem>>, vector<1x128xf32>
    %65 = vector.shape_cast %64 : vector<1x128xf32> to vector<128xf32>
    %66 = vector.shape_cast %65 : vector<128xf32> to vector<1x128xf32>
    %67 = vector.broadcast %66 : vector<1x128xf32> to vector<192x128xf32>
    %68 = arith.mulf %63, %67 : vector<192x128xf32>
    %c0_32 = arith.constant 0 : index
    %c0_33 = arith.constant 0 : index
    %69 = vector.load %arg5[%c0_32, %c0_33] : memref<1x128xf32, #tpu.memory_space<vmem>>, vector<1x128xf32>
    %70 = vector.shape_cast %69 : vector<1x128xf32> to vector<128xf32>
    %71 = vector.shape_cast %70 : vector<128xf32> to vector<1x128xf32>
    %72 = vector.broadcast %71 : vector<1x128xf32> to vector<192x128xf32>
    %73 = arith.addf %68, %72 : vector<192x128xf32>
    %cst_34 = arith.constant 0.000000e+00 : f32
    %74 = vector.broadcast %cst_34 : f32 to vector<192x128xf32>
    %75 = arith.maximumf %73, %74 : vector<192x128xf32>
    %c191_i32 = arith.constant 191 : i32
    %76 = tpu.dynamic_rotate %75 by %c191_i32 dim 0 : vector<192x128xf32>, i32 -> vector<192x128xf32>
    %77 = arith.maximumf %75, %76 : vector<192x128xf32>
    %78 = vector.shape_cast %77 : vector<192x128xf32> to vector<4x2x24x128xf32>
    %79 = vector.extract_strided_slice %78 {offsets = [0, 0, 0, 0], sizes = [4, 1, 24, 128], strides = [1, 1, 1, 1]} : vector<4x2x24x128xf32> to vector<4x1x24x128xf32>
    %80 = vector.shape_cast %79 : vector<4x1x24x128xf32> to vector<4x24x128xf32>
    %81 = vector.extract_strided_slice %78 {offsets = [0, 1, 0, 0], sizes = [4, 1, 24, 128], strides = [1, 1, 1, 1]} : vector<4x2x24x128xf32> to vector<4x1x24x128xf32>
    %82 = vector.shape_cast %81 : vector<4x1x24x128xf32> to vector<4x24x128xf32>
    %83 = arith.maximumf %80, %82 : vector<4x24x128xf32>
    %84 = vector.extract_strided_slice %83 {offsets = [0, 0, 0], sizes = [4, 16, 128], strides = [1, 1, 1]} : vector<4x24x128xf32> to vector<4x16x128xf32>
    %85 = vector.shape_cast %84 : vector<4x16x128xf32> to vector<1x4x16x128xf32>
    %c0_35 = arith.constant 0 : index
    %c0_36 = arith.constant 0 : index
    %c0_37 = arith.constant 0 : index
    %c0_38 = arith.constant 0 : index
    %86 = vector.load %arg6[%c0_35, %c0_36, %c0_37, %c0_38] : memref<1x4x16x128xf32, #tpu.memory_space<vmem>>, vector<1x4x16x128xf32>
    tpu.vector_store %arg6[%c0_35, %c0_36, %c0_37, %c0_38], %85 {strides = array<i32>} : memref<1x4x16x128xf32, #tpu.memory_space<vmem>>, vector<1x4x16x128xf32>,
    return
  }
  func.func @transform_0(%arg0: i32, %arg1: i32) -> (i32, i32, i32, i32) {
    %c0_i32 = arith.constant 0 : i32
    %c0_i32_0 = arith.constant 0 : i32
    %c0_i32_1 = arith.constant 0 : i32
    %c0_i32_2 = arith.constant 0 : i32
    return %arg0, %c0_i32, %c0_i32_0, %c0_i32_1 : i32, i32, i32, i32
  }
  func.func @transform_1(%arg0: i32, %arg1: i32) -> (i32, i32, i32) {
    %c0_i32 = arith.constant 0 : i32
    %c0_i32_0 = arith.constant 0 : i32
    %c0_i32_1 = arith.constant 0 : i32
    %c0_i32_2 = arith.constant 0 : i32
    return %c0_i32, %c0_i32_0, %c0_i32_1 : i32, i32, i32
  }
  func.func @transform_2(%arg0: i32, %arg1: i32) -> (i32, i32) {
    %c0_i32 = arith.constant 0 : i32
    %c0_i32_0 = arith.constant 0 : i32
    %c0_i32_1 = arith.constant 0 : i32
    return %c0_i32, %c0_i32_0 : i32, i32
  }
  func.func @transform_3(%arg0: i32, %arg1: i32) -> (i32, i32) {
    %c0_i32 = arith.constant 0 : i32
    %c0_i32_0 = arith.constant 0 : i32
    %c0_i32_1 = arith.constant 0 : i32
    return %c0_i32, %c0_i32_0 : i32, i32
  }
  func.func @transform_4(%arg0: i32, %arg1: i32) -> (i32, i32, i32, i32) {
    %c0_i32 = arith.constant 0 : i32
    %c0_i32_0 = arith.constant 0 : i32
    %c0_i32_1 = arith.constant 0 : i32
    return %arg0, %arg1, %c0_i32, %c0_i32_0 : i32, i32, i32, i32
  }
}

</mosaic_0001>

<llo_original>
// kernel: tpu_custom_call.1
$region0: #{tpu_custom_call.1}
  #allocation0 [shape = 'u32[]', space=smem, size = 0x4, offset = 0x4, fixed_abs, tag = 'smem constant byte address 0x4 - core index']
  #allocation1 [shape = 'u32[72,128]{1,0:T(1,128)}', space=vmem, size = 0x9000, scoped, tag = 'internal scratch']
  %s0 = inlined_call_operand.vmem [shape: bf16[2,18,24,8], index: 0, kind: input, shape index: {}]
  %s1 = inlined_call_operand.vmem [shape: bf16[9,8,128], index: 1, kind: input, shape index: {}]
  %s2 = inlined_call_operand.vmem [shape: f32[1,128], index: 2, kind: input, shape index: {}]
  %s3 = inlined_call_operand.vmem [shape: f32[1,128], index: 3, kind: input, shape index: {}]
  %s4 = inlined_call_operand.hbm [shape: f32[2,8,16,128], index: 4, kind: output, shape index: {}]
  %s5 = sld [smem:[#allocation0]]
  $region49: #{tpu_custom_call.1} parent=0
    _
  %s7 = ssub.s32 1, %s5
  %s8 = scalar_select 0, %s7, %s5
  $region1: #{tpu_custom_call.1} parent=0
    #allocation2 [shape = 'u8[65536]{0}', space=vmem, size = 0x10000, scoped, tag = 'output window, operand 0']
    #allocation3 [shape = 's32[2]{0}', space=sflag, size = 0x8, scoped, tag = 'scoped memory for tpu_custom_call.1']
    %9 = vsyncpa [#allocation3], 0
    %s10 = scalar_lea.sflag [#allocation3], 1
    %11 = vsyncpa %s10, 0
    loop: start=0, step=1, limit=6
    $region2: #{tpu_custom_call.1} parent=1 // loop_pre_header
      _
    $region3: #{tpu_custom_call.1} parent=1 // loop_header
      %s13 = sphi 0, %s17
      %p14 = scmp.ge.s32.totalorder %s13, 6
      %s20 = sphi 0, %s32
      %s21 = sphi 0, %s28
      %s22 = sphi 0, %s20
      %s23 = sphi 0, %s21
      %s24 = sphi 0, %s22
      %s25 = sphi 0, %s23
      %s35 = sphi 0, %s37
      %s38 = sphi 0, %s35
      %s39 = sphi 0, %s38
      %s55 = sphi 0, %s39
      %s59 = sphi 0, %s59
      %s61 = sphi 0, %s59
      %s62 = sphi 0, %s61
      %s76 = sphi 0, %s62
      %s80 = sphi 0, %s80
      %s82 = sphi 0, %s80
      %s83 = sphi 0, %s82
      %s97 = sphi 0, %s83
      %s101 = sphi 0, %s101
      %s103 = sphi 0, %s101
      %s104 = sphi 0, %s103
      %s118 = sphi 0, %s104
      %s126 = sphi 0, %s128
      %s129 = sphi 0, %s126
      %s130 = sphi 0, %s129
      %s146 = sphi 0, %s130
    $region4: #{tpu_custom_call.1} parent=1 // loop_header_branch
      %16 = sbr.rel (%p14) target = $region8
    $region5: #{tpu_custom_call.1} parent=1 // loop_body
      %s18 = ssub.s32 %s13, 1
      %s19 = ssub.s32 %s13, 2
      %s26 = sadd.s32 1, %s21
      %p27 = scmp.ge.s32.totalorder %s26, 2
      %s28 = scalar_select %p27, 0, %s26
      %s29 = sadd.s32 1, %s20
      %s30 = scalar_select %p27, %s29, %s20
      %p31 = scmp.ge.s32.totalorder %s30, 2
      %s32 = scalar_select %p31, 0, %s30
      %s33 = ssub.s32 %s20, %s32
      %p34 = scmp.eq.s32.totalorder %s33, 0
      %s36 = sadd.s32 %s35, 1
      %s37 = scalar_select %p34, %s35, %s36
      %p40 = pneg %p34
      %p41 = scmp.eq.s32.totalorder %s13, 3
      %p42 = por %p40, %p41
      %p43 = scmp.ne.s32.totalorder %s35, %s38
      %p44 = scmp.eq.s32.totalorder %s13, 0
      %p45 = por %p43, %p44
      %p46 = scmp.ne.s32.totalorder %s35, %s38
      %p47 = scmp.eq.s32.totalorder %s18, 3
      %p48 = por %p46, %p47
      %p49 = scmp.ne.s32.totalorder %s38, %s39
      %p50 = scmp.eq.s32.totalorder %s18, 0
      %p51 = por %p49, %p50
      %p52 = scmp.ne.s32.totalorder %s38, %s39
      %p53 = scmp.eq.s32.totalorder %s19, 3
      %p54 = por %p52, %p53
      %p56 = scmp.ne.s32.totalorder %s39, %s55
      %p57 = scmp.eq.s32.totalorder %s19, 0
      %p58 = por %p56, %p57
      %s60 = sadd.s32 %s59, 1
      %p63 = scmp.eq.s32.totalorder %s13, 3
      %p64 = scmp.ne.s32.totalorder %s59, %s61
      %p65 = scmp.eq.s32.totalorder %s13, 0
      %p66 = por %p64, %p65
      %p67 = scmp.ne.s32.totalorder %s59, %s61
      %p68 = scmp.eq.s32.totalorder %s18, 3
      %p69 = por %p67, %p68
      %p70 = scmp.ne.s32.totalorder %s61, %s62
      %p71 = scmp.eq.s32.totalorder %s18, 0
      %p72 = por %p70, %p71
      %p73 = scmp.ne.s32.totalorder %s61, %s62
      %p74 = scmp.eq.s32.totalorder %s19, 3
      %p75 = por %p73, %p74
      %p77 = scmp.ne.s32.totalorder %s62, %s76
      %p78 = scmp.eq.s32.totalorder %s19, 0
      %p79 = por %p77, %p78
      %s81 = sadd.s32 %s80, 1
      %p84 = scmp.eq.s32.totalorder %s13, 3
      %p85 = scmp.ne.s32.totalorder %s80, %s82
      %p86 = scmp.eq.s32.totalorder %s13, 0
      %p87 = por %p85, %p86
      %p88 = scmp.ne.s32.totalorder %s80, %s82
      %p89 = scmp.eq.s32.totalorder %s18, 3
      %p90 = por %p88, %p89
      %p91 = scmp.ne.s32.totalorder %s82, %s83
      %p92 = scmp.eq.s32.totalorder %s18, 0
      %p93 = por %p91, %p92
      %p94 = scmp.ne.s32.totalorder %s82, %s83
      %p95 = scmp.eq.s32.totalorder %s19, 3
      %p96 = por %p94, %p95
      %p98 = scmp.ne.s32.totalorder %s83, %s97
      %p99 = scmp.eq.s32.totalorder %s19, 0
      %p100 = por %p98, %p99
      %s102 = sadd.s32 %s101, 1
      %p105 = scmp.eq.s32.totalorder %s13, 3
      %p106 = scmp.ne.s32.totalorder %s101, %s103
      %p107 = scmp.eq.s32.totalorder %s13, 0
      %p108 = por %p106, %p107
      %p109 = scmp.ne.s32.totalorder %s101, %s103
      %p110 = scmp.eq.s32.totalorder %s18, 3
      %p111 = por %p109, %p110
      %p112 = scmp.ne.s32.totalorder %s103, %s104
      %p113 = scmp.eq.s32.totalorder %s18, 0
      %p114 = por %p112, %p113
      %p115 = scmp.ne.s32.totalorder %s103, %s104
      %p116 = scmp.eq.s32.totalorder %s19, 3
      %p117 = por %p115, %p116
      %p119 = scmp.ne.s32.totalorder %s104, %s118
      %p120 = scmp.eq.s32.totalorder %s19, 0
      %p121 = por %p119, %p120
      %s122 = ssub.s32 %s20, %s32
      %s123 = ssub.s32 %s21, %s28
      %s124 = sor.u32 %s122, %s123
      %p125 = scmp.eq.s32.totalorder %s124, 0
      %s127 = sadd.s32 %s126, 1
      %s128 = scalar_select %p125, %s126, %s127
      %p131 = pneg %p125
      %p132 = scmp.eq.s32.totalorder %s13, 3
      %p133 = por %p131, %p132
      %p134 = scmp.ne.s32.totalorder %s126, %s129
      %p135 = scmp.eq.s32.totalorder %s13, 0
      %p136 = por %p134, %p135
      %p137 = scmp.ne.s32.totalorder %s126, %s129
      %p138 = scmp.eq.s32.totalorder %s18, 3
      %p139 = por %p137, %p138
      %p140 = scmp.ne.s32.totalorder %s129, %s130
      %p141 = scmp.eq.s32.totalorder %s18, 0
      %p142 = por %p140, %p141
      %p143 = scmp.ne.s32.totalorder %s129, %s130
      %p144 = scmp.eq.s32.totalorder %s19, 3
      %p145 = por %p143, %p144
      %p147 = scmp.ne.s32.totalorder %s130, %s146
      %p148 = scmp.eq.s32.totalorder %s19, 0
      %p149 = por %p147, %p148
      %p150 = scmp.le.s32.totalorder 1, %s13
      %p151 = scmp.lt.s32.totalorder %s13, 5
      %p152 = pnand %p150, %p151
      %p153 = pneg %p152
      // Predicated region
      $region9: #{tpu_custom_call.1} parent=5 // pred_check
        _
      $region10: #{tpu_custom_call.1} parent=5 // pred_check_branch
        %155 = sbr.rel (%p152) target = $region12
      $region11: #{tpu_custom_call.1} parent=5 // pred_region
        %s156 = ssub.s32 %s13, 1
        // Predicated region
        $region13: #{tpu_custom_call.1} parent=11 // pred_check
          %p157 = pneg %p72
        $region14: #{tpu_custom_call.1} parent=11 // pred_check_branch
          %159 = sbr.rel (%p157) target = $region16
        $region15: #{tpu_custom_call.1} parent=11 // pred_region
          _
        $region16: #{tpu_custom_call.1} parent=11 // pred_fallthru
          _
        // Predicated region
        $region17: #{tpu_custom_call.1} parent=11 // pred_check
          %p160 = pneg %p93
        $region18: #{tpu_custom_call.1} parent=11 // pred_check_branch
          %162 = sbr.rel (%p160) target = $region20
        $region19: #{tpu_custom_call.1} parent=11 // pred_region
          _
        $region20: #{tpu_custom_call.1} parent=11 // pred_fallthru
          _
        // Predicated region
        $region21: #{tpu_custom_call.1} parent=11 // pred_check
          %p163 = pneg %p114
        $region22: #{tpu_custom_call.1} parent=11 // pred_check_branch
          %165 = sbr.rel (%p163) target = $region24
        $region23: #{tpu_custom_call.1} parent=11 // pred_region
          _
        $region24: #{tpu_custom_call.1} parent=11 // pred_fallthru
          _
      $region12: #{tpu_custom_call.1} parent=5 // pred_fallthru
        _
      %p166 = scmp.lt.s32.totalorder %s13, 4
      // Predicated region
      $region25: #{tpu_custom_call.1} parent=5 // pred_check
        %p167 = pneg %p166
      $region26: #{tpu_custom_call.1} parent=5 // pred_check_branch
        %169 = sbr.rel (%p167) target = $region28
      $region27: #{tpu_custom_call.1} parent=5 // pred_region
        // Predicated region
        $region29: #{tpu_custom_call.1} parent=27 // pred_check
          %p170 = pneg %p45
        $region30: #{tpu_custom_call.1} parent=27 // pred_check_branch
          %172 = sbr.rel (%p170) target = $region32
        $region31: #{tpu_custom_call.1} parent=27 // pred_region
          %p173 = scmp.lt.s32.totalorder %s20, 1
          %s174 = scalar_select %p173, %s20, 1
          %s175 = smul.addr %s174, 54
          %s176 = smul.addr %s175, 4
          %s177 = scalar_lea.vmem %s0, %s176
        $region32: #{tpu_custom_call.1} parent=27 // pred_fallthru
          _
      $region28: #{tpu_custom_call.1} parent=5 // pred_fallthru
        _
      %p178 = scmp.le.s32.totalorder 1, %s13
      %p179 = scmp.lt.s32.totalorder %s13, 5
      %p180 = pnand %p178, %p179
      %p181 = pneg %p180
      // Predicated region
      $region33: #{tpu_custom_call.1} parent=5 // pred_check
        _
      $region34: #{tpu_custom_call.1} parent=5 // pred_check_branch
        %183 = sbr.rel (%p180) target = $region36
      $region35: #{tpu_custom_call.1} parent=5 // pred_region
        %s184 = ssub.s32 %s13, 1
        %p185 = scmp.lt.s32.totalorder %s22, 1
        %s186 = scalar_select %p185, %s22, 1
        %s187 = smul.addr %s186, 54
        %s188 = smul.addr %s187, 4
        %s189 = scalar_lea.vmem %s0, %s188
        %p190 = pneg %p51
        %p191 = pneg %p48
        %p192 = pneg %p72
        %p193 = pneg %p69
        %p194 = pneg %p93
        %p195 = pneg %p90
        %p196 = pneg %p114
        %p197 = pneg %p111
        %p198 = pneg %p142
        %p199 = pneg %p139
        %s200 = sand.u32 %s129, 1
        %s201 = scalar_lea.sflag [#allocation3], %s200
        %s202 = sand.u32 %s129, 1
        %s203 = smul.addr %s202, 64
        %s204 = scalar_lea.vmem [#allocation2], %s203
        %p205 = scmp.lt.s32.totalorder %s22, 1
        %s206 = scalar_select %p205, %s22, 1
        %s207 = smul.addr %s206, 54
        %s208 = smul.addr %s207, 4
        %s209 = scalar_lea.vmem %s0, %s208
        %s210 = smul.u32 4, %s23
        %s212 = smul.u32 %s23, 8
        %s213 = smul.u32 %s212, 3
        %s214 = smul.addr %s213, 4
        %s215 = scalar_lea.vmem %s209, %s214
        %v216 = vld [vmem:[%s215] sm:$0xf]
        %v217 = vld [vmem:[%s215 + $0x4] sm:$0xf]
        %v218 = vld [vmem:[%s215 + $0x8] sm:$0xf]
        %v219 = vld [vmem:[%s215 + $0xc] sm:$0xf]
        %v220 = vld [vmem:[%s215 + $0x10] sm:$0xf]
        %v221 = vld [vmem:[%s215 + $0x14] sm:$0xf]
        %v222 = vld [vmem:[%s215 + $0x18] sm:$0xf]
        %v223 = vld [vmem:[%s215 + $0x1c] sm:$0xf]
        %v224 = vld [vmem:[%s215 + $0x20] sm:$0xf]
        %v225 = vld [vmem:[%s215 + $0x24] sm:$0xf]
        %v226 = vld [vmem:[%s215 + $0x28] sm:$0xf]
        %v227 = vld [vmem:[%s215 + $0x2c] sm:$0xf]
        %v228 = vld [vmem:[%s215 + $0x30] sm:$0xf]
        %v229 = vld [vmem:[%s215 + $0x34] sm:$0xf]
        %v230 = vld [vmem:[%s215 + $0x38] sm:$0xf]
        %v231 = vld [vmem:[%s215 + $0x3c] sm:$0xf]
        %v232 = vld [vmem:[%s215 + $0x40] sm:$0xf]
        %v233 = vld [vmem:[%s215 + $0x44] sm:$0xf]
        %v234 = vld [vmem:[%s215 + $0x48] sm:$0xf]
        %v235 = vld [vmem:[%s215 + $0x4c] sm:$0xf]
        %v236 = vld [vmem:[%s215 + $0x50] sm:$0xf]
        %v237 = vld [vmem:[%s215 + $0x54] sm:$0xf]
        %v238 = vld [vmem:[%s215 + $0x58] sm:$0xf]
        %v239 = vld [vmem:[%s215 + $0x5c] sm:$0xf]
        %v240 = vld [vmem:[%s215 + $0x60] sm:$0xf]
        %v241 = vld [vmem:[%s215 + $0x64] sm:$0xf]
        %v242 = vld [vmem:[%s215 + $0x68] sm:$0xf]
        %v243 = vld [vmem:[%s215 + $0x6c] sm:$0xf]
        %v244 = vld [vmem:[%s215 + $0x70] sm:$0xf]
        %v245 = vld [vmem:[%s215 + $0x74] sm:$0xf]
        %v246 = vunpack.c.l.bf16 %v216
        %v247 = vunpack.c.l.bf16 %v217
        %v248 = vunpack.c.l.bf16 %v218
        %v249 = vunpack.c.l.bf16 %v219
        %v250 = vunpack.c.l.bf16 %v220
        %v251 = vunpack.c.l.bf16 %v221
        %v252 = vunpack.c.l.bf16 %v222
        %v253 = vunpack.c.l.bf16 %v223
        %v254 = vunpack.c.l.bf16 %v224
        %v255 = vunpack.c.l.bf16 %v225
        %v256 = vunpack.c.l.bf16 %v226
        %v257 = vunpack.c.l.bf16 %v227
        %v258 = vunpack.c.l.bf16 %v228
        %v259 = vunpack.c.l.bf16 %v229
        %v260 = vunpack.c.l.bf16 %v230
        %v261 = vunpack.c.l.bf16 %v231
        %v262 = vunpack.c.l.bf16 %v232
        %v263 = vunpack.c.l.bf16 %v233
        %v264 = vunpack.c.l.bf16 %v234
        %v265 = vunpack.c.l.bf16 %v235
        %v266 = vunpack.c.l.bf16 %v236
        %v267 = vunpack.c.l.bf16 %v237
        %v268 = vunpack.c.l.bf16 %v238
        %v269 = vunpack.c.l.bf16 %v239
        %v270 = vunpack.c.l.bf16 %v240
        %v271 = vunpack.c.l.bf16 %v241
        %v272 = vunpack.c.l.bf16 %v242
        %v273 = vunpack.c.l.bf16 %v243
        %v274 = vunpack.c.l.bf16 %v244
        %v275 = vunpack.c.l.bf16 %v245
        %v276 = vrot.slane %v246, 1
        %v277 = vrot.slane %v247, 1
        %v278 = vrot.slane %v248, 1
        %v279 = vrot.slane %v249, 1
        %v280 = vrot.slane %v250, 1
        %v281 = vrot.slane %v251, 1
        %v282 = vrot.slane %v252, 1
        %v283 = vrot.slane %v253, 1
        %v284 = vrot.slane %v254, 1
        %v285 = vrot.slane %v255, 1
        %v286 = vrot.slane %v256, 1
        %v287 = vrot.slane %v257, 1
        %v288 = vrot.slane %v258, 1
        %v289 = vrot.slane %v259, 1
        %v290 = vrot.slane %v260, 1
        %v291 = vrot.slane %v261, 1
        %v292 = vrot.slane %v262, 1
        %v293 = vrot.slane %v263, 1
        %v294 = vrot.slane %v264, 1
        %v295 = vrot.slane %v265, 1
        %v296 = vrot.slane %v266, 1
        %v297 = vrot.slane %v267, 1
        %v298 = vrot.slane %v268, 1
        %v299 = vrot.slane %v269, 1
        %v300 = vrot.slane %v270, 1
        %v301 = vrot.slane %v271, 1
        %v302 = vrot.slane %v272, 1
        %v303 = vrot.slane %v273, 1
        %v304 = vrot.slane %v274, 1
        %v305 = vrot.slane %v275, 1
        %v306 = vlaneseq
        %v307 = vshrl.u32 %v306, 7
        %vm308 = vcmp.lt.s32.totalorder %v307, 7
        %v309 = vsel %vm308, %v304, %v305
        %v310 = vsel %vm308, %v303, %v304
        %v311 = vsel %vm308, %v302, %v303
        %v312 = vsel %vm308, %v301, %v302
        %v313 = vsel %vm308, %v300, %v301
        %v314 = vsel %vm308, %v299, %v300
        %v315 = vsel %vm308, %v298, %v299
        %v316 = vsel %vm308, %v297, %v298
        %v317 = vsel %vm308, %v296, %v297
        %v318 = vsel %vm308, %v295, %v296
        %v319 = vsel %vm308, %v294, %v295
        %v320 = vsel %vm308, %v293, %v294
        %v321 = vsel %vm308, %v292, %v293
        %v322 = vsel %vm308, %v291, %v292
        %v323 = vsel %vm308, %v290, %v291
        %v324 = vsel %vm308, %v289, %v290
        %v325 = vsel %vm308, %v288, %v289
        %v326 = vsel %vm308, %v287, %v288
        %v327 = vsel %vm308, %v286, %v287
        %v328 = vsel %vm308, %v285, %v286
        %v329 = vsel %vm308, %v284, %v285
        %v330 = vsel %vm308, %v283, %v284
        %v331 = vsel %vm308, %v282, %v283
        %v332 = vsel %vm308, %v281, %v282
        %v333 = vsel %vm308, %v280, %v281
        %v334 = vsel %vm308, %v279, %v280
        %v335 = vsel %vm308, %v278, %v279
        %v336 = vsel %vm308, %v277, %v278
        %v337 = vsel %vm308, %v276, %v277
        %v338 = vsel %vm308, %v305, %v276
        %v339 = vrot.slane %v246, 2
        %v340 = vrot.slane %v247, 2
        %v341 = vrot.slane %v248, 2
        %v342 = vrot.slane %v249, 2
        %v343 = vrot.slane %v250, 2
        %v344 = vrot.slane %v251, 2
        %v345 = vrot.slane %v252, 2
        %v346 = vrot.slane %v253, 2
        %v347 = vrot.slane %v254, 2
        %v348 = vrot.slane %v255, 2
        %v349 = vrot.slane %v256, 2
        %v350 = vrot.slane %v257, 2
        %v351 = vrot.slane %v258, 2
        %v352 = vrot.slane %v259, 2
        %v353 = vrot.slane %v260, 2
        %v354 = vrot.slane %v261, 2
        %v355 = vrot.slane %v262, 2
        %v356 = vrot.slane %v263, 2
        %v357 = vrot.slane %v264, 2
        %v358 = vrot.slane %v265, 2
        %v359 = vrot.slane %v266, 2
        %v360 = vrot.slane %v267, 2
        %v361 = vrot.slane %v268, 2
        %v362 = vrot.slane %v269, 2
        %v363 = vrot.slane %v270, 2
        %v364 = vrot.slane %v271, 2
        %v365 = vrot.slane %v272, 2
        %v366 = vrot.slane %v273, 2
        %v367 = vrot.slane %v274, 2
        %v368 = vrot.slane %v275, 2
        %vm369 = vcmp.lt.s32.totalorder %v307, 6
        %v370 = vsel %vm369, %v367, %v368
        %v371 = vsel %vm369, %v366, %v367
        %v372 = vsel %vm369, %v365, %v366
        %v373 = vsel %vm369, %v364, %v365
        %v374 = vsel %vm369, %v363, %v364
        %v375 = vsel %vm369, %v362, %v363
        %v376 = vsel %vm369, %v361, %v362
        %v377 = vsel %vm369, %v360, %v361
        %v378 = vsel %vm369, %v359, %v360
        %v379 = vsel %vm369, %v358, %v359
        %v380 = vsel %vm369, %v357, %v358
        %v381 = vsel %vm369, %v356, %v357
        %v382 = vsel %vm369, %v355, %v356
        %v383 = vsel %vm369, %v354, %v355
        %v384 = vsel %vm369, %v353, %v354
        %v385 = vsel %vm369, %v352, %v353
        %v386 = vsel %vm369, %v351, %v352
        %v387 = vsel %vm369, %v350, %v351
        %v388 = vsel %vm369, %v349, %v350
        %v389 = vsel %vm369, %v348, %v349
        %v390 = vsel %vm369, %v347, %v348
        %v391 = vsel %vm369, %v346, %v347
        %v392 = vsel %vm369, %v345, %v346
        %v393 = vsel %vm369, %v344, %v345
        %v394 = vsel %vm369, %v343, %v344
        %v395 = vsel %vm369, %v342, %v343
        %v396 = vsel %vm369, %v341, %v342
        %v397 = vsel %vm369, %v340, %v341
        %v398 = vsel %vm369, %v339, %v340
        %v399 = vsel %vm369, %v368, %v339
        %v400 = vpack.c.bf16 %v247, %v246
        %v401 = vpack.c.bf16 %v249, %v248
        %v402 = vpack.c.bf16 %v251, %v250
        %v403 = vpack.c.bf16 %v253, %v252
        %v404 = vpack.c.bf16 %v255, %v254
        %v405 = vpack.c.bf16 %v257, %v256
        %v406 = vpack.c.bf16 %v259, %v258
        %v407 = vpack.c.bf16 %v261, %v260
        %v408 = vpack.c.bf16 %v263, %v262
        %v409 = vpack.c.bf16 %v265, %v264
        %v410 = vpack.c.bf16 %v267, %v266
        %v411 = vpack.c.bf16 %v269, %v268
        %v412 = vpack.c.bf16 %v336, %v337
        %v413 = vpack.c.bf16 %v334, %v335
        %v414 = vpack.c.bf16 %v332, %v333
        %v415 = vpack.c.bf16 %v330, %v331
        %v416 = vpack.c.bf16 %v328, %v329
        %v417 = vpack.c.bf16 %v326, %v327
        %v418 = vpack.c.bf16 %v324, %v325
        %v419 = vpack.c.bf16 %v322, %v323
        %v420 = vpack.c.bf16 %v320, %v321
        %v421 = vpack.c.bf16 %v318, %v319
        %v422 = vpack.c.bf16 %v316, %v317
        %v423 = vpack.c.bf16 %v314, %v315
        %v424 = vpack.c.bf16 %v397, %v398
        %v425 = vpack.c.bf16 %v395, %v396
        %v426 = vpack.c.bf16 %v393, %v394
        %v427 = vpack.c.bf16 %v391, %v392
        %v428 = vpack.c.bf16 %v389, %v390
        %v429 = vpack.c.bf16 %v387, %v388
        %v430 = vpack.c.bf16 %v385, %v386
        %v431 = vpack.c.bf16 %v383, %v384
        %v432 = vpack.c.bf16 %v381, %v382
        %v433 = vpack.c.bf16 %v379, %v380
        %v434 = vpack.c.bf16 %v377, %v378
        %v435 = vpack.c.bf16 %v375, %v376
        %v436 = vpack.c.bf16 %v250, %v249
        %v437 = vpack.c.bf16 %v252, %v251
        %v438 = vpack.c.bf16 %v254, %v253
        %v439 = vpack.c.bf16 %v256, %v255
        %v440 = vpack.c.bf16 %v258, %v257
        %v441 = vpack.c.bf16 %v260, %v259
        %v442 = vpack.c.bf16 %v262, %v261
        %v443 = vpack.c.bf16 %v264, %v263
        %v444 = vpack.c.bf16 %v266, %v265
        %v445 = vpack.c.bf16 %v268, %v267
        %v446 = vpack.c.bf16 %v270, %v269
        %v447 = vpack.c.bf16 %v272, %v271
        %v448 = vpack.c.bf16 %v333, %v334
        %v449 = vpack.c.bf16 %v331, %v332
        %v450 = vpack.c.bf16 %v329, %v330
        %v451 = vpack.c.bf16 %v327, %v328
        %v452 = vpack.c.bf16 %v325, %v326
        %v453 = vpack.c.bf16 %v323, %v324
        %v454 = vpack.c.bf16 %v321, %v322
        %v455 = vpack.c.bf16 %v319, %v320
        %v456 = vpack.c.bf16 %v317, %v318
        %v457 = vpack.c.bf16 %v315, %v316
        %v458 = vpack.c.bf16 %v313, %v314
        %v459 = vpack.c.bf16 %v311, %v312
        %v460 = vpack.c.bf16 %v394, %v395
        %v461 = vpack.c.bf16 %v392, %v393
        %v462 = vpack.c.bf16 %v390, %v391
        %v463 = vpack.c.bf16 %v388, %v389
        %v464 = vpack.c.bf16 %v386, %v387
        %v465 = vpack.c.bf16 %v384, %v385
        %v466 = vpack.c.bf16 %v382, %v383
        %v467 = vpack.c.bf16 %v380, %v381
        %v468 = vpack.c.bf16 %v378, %v379
        %v469 = vpack.c.bf16 %v376, %v377
        %v470 = vpack.c.bf16 %v374, %v375
        %v471 = vpack.c.bf16 %v372, %v373
        %v472 = vpack.c.bf16 %v271, %v270
        %v473 = vpack.c.bf16 %v273, %v272
        %v474 = vpack.c.bf16 %v275, %v274
        %v475 = vpack.c.bf16 %v312, %v313
        %v476 = vpack.c.bf16 %v310, %v311
        %v477 = vpack.c.bf16 %v338, %v309
        %v478 = vpack.c.bf16 %v373, %v374
        %v479 = vpack.c.bf16 %v371, %v372
        %v480 = vpack.c.bf16 %v399, %v370
        %v481 = vld [vmem:[%s1] sm:$0xf]
        %s482 = scalar_lea.vmem %s1, 4
        %v483 = vld [vmem:[%s482] sm:$0xf]
        %vm484 = vcmask 64512
        %v486 = vsel %vm484, %v412, 0
        %v489 = vsel %vm484, %v413, 0
        %v492 = vsel %vm484, %v414, 0
        %v495 = vsel %vm484, %v415, 0
        %v498 = vsel %vm484, %v416, 0
        %v501 = vsel %vm484, %v417, 0
        %v504 = vsel %vm484, %v418, 0
        %v507 = vsel %vm484, %v419, 0
        %v510 = vsel %vm484, %v420, 0
        %v513 = vsel %vm484, %v421, 0
        %v516 = vsel %vm484, %v422, 0
        %v519 = vsel %vm484, %v423, 0
        %vm521 = vcmask 1043456
        %v523 = vsel %vm521, %v483, 0
        %525 = vmatpush.bf16.msra.mxu0 0
        %526 = vmatpush.bf16.msra.mxu0 0
        %527 = vmatpush.bf16.msra.mxu0 0
        %528 = vmatpush.bf16.msra.mxu0 0
        %529 = vmatpush.bf16.msra.mxu0 0
        %530 = vmatpush.bf16.msra.mxu0 0
        %531 = vmatpush.bf16.msra.mxu0 0
        %532 = vmatpush.bf16.msra.mxu0 %v523
        %533 = vmatmul.bf16.gmra.mxu0 %v486
        %v534 = vpop.f32.mrf.mxu0
        %v535 = vadd.f32 0.0, %v534
        %v536 = vpop.f32.mrf.mxu0
        %v537 = vadd.f32 0.0, %v536
        %538 = vmatmul.bf16.gmra.mxu0 %v489
        %v539 = vpop.f32.mrf.mxu0
        %v540 = vadd.f32 0.0, %v539
        %v541 = vpop.f32.mrf.mxu0
        %v542 = vadd.f32 0.0, %v541
        %543 = vmatmul.bf16.gmra.mxu0 %v492
        %v544 = vpop.f32.mrf.mxu0
        %v545 = vadd.f32 0.0, %v544
        %v546 = vpop.f32.mrf.mxu0
        %v547 = vadd.f32 0.0, %v546
        %548 = vmatmul.bf16.gmra.mxu0 %v495
        %v549 = vpop.f32.mrf.mxu0
        %v550 = vadd.f32 0.0, %v549
        %v551 = vpop.f32.mrf.mxu0
        %v552 = vadd.f32 0.0, %v551
        %553 = vmatmul.bf16.gmra.mxu0 %v498
        %v554 = vpop.f32.mrf.mxu0
        %v555 = vadd.f32 0.0, %v554
        %v556 = vpop.f32.mrf.mxu0
        %v557 = vadd.f32 0.0, %v556
        %558 = vmatmul.bf16.gmra.mxu0 %v501
        %v559 = vpop.f32.mrf.mxu0
        %v560 = vadd.f32 0.0, %v559
        %v561 = vpop.f32.mrf.mxu0
        %v562 = vadd.f32 0.0, %v561
        %563 = vmatmul.bf16.gmra.mxu0 %v504
        %v564 = vpop.f32.mrf.mxu0
        %v565 = vadd.f32 0.0, %v564
        %v566 = vpop.f32.mrf.mxu0
        %v567 = vadd.f32 0.0, %v566
        %568 = vmatmul.bf16.gmra.mxu0 %v507
        %v569 = vpop.f32.mrf.mxu0
        %v570 = vadd.f32 0.0, %v569
        %v571 = vpop.f32.mrf.mxu0
        %v572 = vadd.f32 0.0, %v571
        %573 = vmatmul.bf16.gmra.mxu0 %v510
        %v574 = vpop.f32.mrf.mxu0
        %v575 = vadd.f32 0.0, %v574
        %v576 = vpop.f32.mrf.mxu0
        %v577 = vadd.f32 0.0, %v576
        %578 = vmatmul.bf16.gmra.mxu0 %v513
        %v579 = vpop.f32.mrf.mxu0
        %v580 = vadd.f32 0.0, %v579
        %v581 = vpop.f32.mrf.mxu0
        %v582 = vadd.f32 0.0, %v581
        %583 = vmatmul.bf16.gmra.mxu0 %v516
        %v584 = vpop.f32.mrf.mxu0
        %v585 = vadd.f32 0.0, %v584
        %v586 = vpop.f32.mrf.mxu0
        %v587 = vadd.f32 0.0, %v586
        %588 = vmatmul.bf16.gmra.mxu0 %v519
        %v589 = vpop.f32.mrf.mxu0
        %v590 = vadd.f32 0.0, %v589
        %v591 = vpop.f32.mrf.mxu0
        %v592 = vadd.f32 0.0, %v591
        %593 = vdwg.mxu0
        %v595 = vsel %vm484, %v400, 0
        %v598 = vsel %vm484, %v401, 0
        %v601 = vsel %vm484, %v402, 0
        %v604 = vsel %vm484, %v403, 0
        %v607 = vsel %vm484, %v404, 0
        %v610 = vsel %vm484, %v405, 0
        %v613 = vsel %vm484, %v406, 0
        %v616 = vsel %vm484, %v407, 0
        %v619 = vsel %vm484, %v408, 0
        %v622 = vsel %vm484, %v409, 0
        %v625 = vsel %vm484, %v410, 0
        %v628 = vsel %vm484, %v411, 0
        %v631 = vsel %vm521, %v481, 0
        %633 = vmatpush.bf16.msra.mxu0 0
        %634 = vmatpush.bf16.msra.mxu0 0
        %635 = vmatpush.bf16.msra.mxu0 0
        %636 = vmatpush.bf16.msra.mxu0 0
        %637 = vmatpush.bf16.msra.mxu0 0
        %638 = vmatpush.bf16.msra.mxu0 0
        %639 = vmatpush.bf16.msra.mxu0 0
        %640 = vmatpush.bf16.msra.mxu0 %v631
        %641 = vmatmul.bf16.gmra.mxu0 %v595
        %v642 = vpop.f32.mrf.mxu0
        %v643 = vadd.f32 %v535, %v642
        %v644 = vpop.f32.mrf.mxu0
        %v645 = vadd.f32 %v537, %v644
        %646 = vmatmul.bf16.gmra.mxu0 %v598
        %v647 = vpop.f32.mrf.mxu0
        %v648 = vadd.f32 %v540, %v647
        %v649 = vpop.f32.mrf.mxu0
        %v650 = vadd.f32 %v542, %v649
        %651 = vmatmul.bf16.gmra.mxu0 %v601
        %v652 = vpop.f32.mrf.mxu0
        %v653 = vadd.f32 %v545, %v652
        %v654 = vpop.f32.mrf.mxu0
        %v655 = vadd.f32 %v547, %v654
        %656 = vmatmul.bf16.gmra.mxu0 %v604
        %v657 = vpop.f32.mrf.mxu0
        %v658 = vadd.f32 %v550, %v657
        %v659 = vpop.f32.mrf.mxu0
        %v660 = vadd.f32 %v552, %v659
        %661 = vmatmul.bf16.gmra.mxu0 %v607
        %v662 = vpop.f32.mrf.mxu0
        %v663 = vadd.f32 %v555, %v662
        %v664 = vpop.f32.mrf.mxu0
        %v665 = vadd.f32 %v557, %v664
        %666 = vmatmul.bf16.gmra.mxu0 %v610
        %v667 = vpop.f32.mrf.mxu0
        %v668 = vadd.f32 %v560, %v667
        %v669 = vpop.f32.mrf.mxu0
        %v670 = vadd.f32 %v562, %v669
        %671 = vmatmul.bf16.gmra.mxu0 %v613
        %v672 = vpop.f32.mrf.mxu0
        %v673 = vadd.f32 %v565, %v672
        %v674 = vpop.f32.mrf.mxu0
        %v675 = vadd.f32 %v567, %v674
        %676 = vmatmul.bf16.gmra.mxu0 %v616
        %v677 = vpop.f32.mrf.mxu0
        %v678 = vadd.f32 %v570, %v677
        %v679 = vpop.f32.mrf.mxu0
        %v680 = vadd.f32 %v572, %v679
        %681 = vmatmul.bf16.gmra.mxu0 %v619
        %v682 = vpop.f32.mrf.mxu0
        %v683 = vadd.f32 %v575, %v682
        %v684 = vpop.f32.mrf.mxu0
        %v685 = vadd.f32 %v577, %v684
        %686 = vmatmul.bf16.gmra.mxu0 %v622
        %v687 = vpop.f32.mrf.mxu0
        %v688 = vadd.f32 %v580, %v687
        %v689 = vpop.f32.mrf.mxu0
        %v690 = vadd.f32 %v582, %v689
        %691 = vmatmul.bf16.gmra.mxu0 %v625
        %v692 = vpop.f32.mrf.mxu0
        %v693 = vadd.f32 %v585, %v692
        %v694 = vpop.f32.mrf.mxu0
        %v695 = vadd.f32 %v587, %v694
        %696 = vmatmul.bf16.gmra.mxu0 %v628
        %v697 = vpop.f32.mrf.mxu0
        %v698 = vadd.f32 %v590, %v697
        %v699 = vpop.f32.mrf.mxu0
        %v700 = vadd.f32 %v592, %v699
        %701 = vdwg.mxu0
        %s702 = scalar_lea.vmem %s1, 8
        %v703 = vld [vmem:[%s702] sm:$0xf]
        %v705 = vsel %vm484, %v424, 0
        %v708 = vsel %vm484, %v425, 0
        %v711 = vsel %vm484, %v426, 0
        %v714 = vsel %vm484, %v427, 0
        %v717 = vsel %vm484, %v428, 0
        %v720 = vsel %vm484, %v429, 0
        %v723 = vsel %vm484, %v430, 0
        %v726 = vsel %vm484, %v431, 0
        %v729 = vsel %vm484, %v432, 0
        %v732 = vsel %vm484, %v433, 0
        %v735 = vsel %vm484, %v434, 0
        %v738 = vsel %vm484, %v435, 0
        %v741 = vsel %vm521, %v703, 0
        %743 = vmatpush.bf16.msra.mxu0 0
        %744 = vmatpush.bf16.msra.mxu0 0
        %745 = vmatpush.bf16.msra.mxu0 0
        %746 = vmatpush.bf16.msra.mxu0 0
        %747 = vmatpush.bf16.msra.mxu0 0
        %748 = vmatpush.bf16.msra.mxu0 0
        %749 = vmatpush.bf16.msra.mxu0 0
        %750 = vmatpush.bf16.msra.mxu0 %v741
        %751 = vmatmul.bf16.gmra.mxu0 %v705
        %v752 = vpop.f32.mrf.mxu0
        %v753 = vadd.f32 0.0, %v752
        %v754 = vpop.f32.mrf.mxu0
        %v755 = vadd.f32 0.0, %v754
        %756 = vmatmul.bf16.gmra.mxu0 %v708
        %v757 = vpop.f32.mrf.mxu0
        %v758 = vadd.f32 0.0, %v757
        %v759 = vpop.f32.mrf.mxu0
        %v760 = vadd.f32 0.0, %v759
        %761 = vmatmul.bf16.gmra.mxu0 %v711
        %v762 = vpop.f32.mrf.mxu0
        %v763 = vadd.f32 0.0, %v762
        %v764 = vpop.f32.mrf.mxu0
        %v765 = vadd.f32 0.0, %v764
        %766 = vmatmul.bf16.gmra.mxu0 %v714
        %v767 = vpop.f32.mrf.mxu0
        %v768 = vadd.f32 0.0, %v767
        %v769 = vpop.f32.mrf.mxu0
        %v770 = vadd.f32 0.0, %v769
        %771 = vmatmul.bf16.gmra.mxu0 %v717
        %v772 = vpop.f32.mrf.mxu0
        %v773 = vadd.f32 0.0, %v772
        %v774 = vpop.f32.mrf.mxu0
        %v775 = vadd.f32 0.0, %v774
        %776 = vmatmul.bf16.gmra.mxu0 %v720
        %v777 = vpop.f32.mrf.mxu0
        %v778 = vadd.f32 0.0, %v777
        %v779 = vpop.f32.mrf.mxu0
        %v780 = vadd.f32 0.0, %v779
        %781 = vmatmul.bf16.gmra.mxu0 %v723
        %v782 = vpop.f32.mrf.mxu0
        %v783 = vadd.f32 0.0, %v782
        %v784 = vpop.f32.mrf.mxu0
        %v785 = vadd.f32 0.0, %v784
        %786 = vmatmul.bf16.gmra.mxu0 %v726
        %v787 = vpop.f32.mrf.mxu0
        %v788 = vadd.f32 0.0, %v787
        %v789 = vpop.f32.mrf.mxu0
        %v790 = vadd.f32 0.0, %v789
        %791 = vmatmul.bf16.gmra.mxu0 %v729
        %v792 = vpop.f32.mrf.mxu0
        %v793 = vadd.f32 0.0, %v792
        %v794 = vpop.f32.mrf.mxu0
        %v795 = vadd.f32 0.0, %v794
        %796 = vmatmul.bf16.gmra.mxu0 %v732
        %v797 = vpop.f32.mrf.mxu0
        %v798 = vadd.f32 0.0, %v797
        %v799 = vpop.f32.mrf.mxu0
        %v800 = vadd.f32 0.0, %v799
        %801 = vmatmul.bf16.gmra.mxu0 %v735
        %v802 = vpop.f32.mrf.mxu0
        %v803 = vadd.f32 0.0, %v802
        %v804 = vpop.f32.mrf.mxu0
        %v805 = vadd.f32 0.0, %v804
        %806 = vmatmul.bf16.gmra.mxu0 %v738
        %v807 = vpop.f32.mrf.mxu0
        %v808 = vadd.f32 0.0, %v807
        %v809 = vpop.f32.mrf.mxu0
        %v810 = vadd.f32 0.0, %v809
        %811 = vdwg.mxu0
        %v812 = vadd.f32 %v643, %v753
        %v813 = vadd.f32 %v645, %v755
        %v814 = vadd.f32 %v648, %v758
        %v815 = vadd.f32 %v650, %v760
        %v816 = vadd.f32 %v653, %v763
        %v817 = vadd.f32 %v655, %v765
        %v818 = vadd.f32 %v658, %v768
        %v819 = vadd.f32 %v660, %v770
        %v820 = vadd.f32 %v663, %v773
        %v821 = vadd.f32 %v665, %v775
        %v822 = vadd.f32 %v668, %v778
        %v823 = vadd.f32 %v670, %v780
        %v824 = vadd.f32 %v673, %v783
        %v825 = vadd.f32 %v675, %v785
        %v826 = vadd.f32 %v678, %v788
        %v827 = vadd.f32 %v680, %v790
        %v828 = vadd.f32 %v683, %v793
        %v829 = vadd.f32 %v685, %v795
        %v830 = vadd.f32 %v688, %v798
        %v831 = vadd.f32 %v690, %v800
        %v832 = vadd.f32 %v693, %v803
        %v833 = vadd.f32 %v695, %v805
        %v834 = vadd.f32 %v698, %v808
        %v835 = vadd.f32 %v700, %v810
        %s836 = scalar_lea.vmem %s1, 12
        %v837 = vld [vmem:[%s836] sm:$0xf]
        %v839 = vsel %vm484, %v436, 0
        %v842 = vsel %vm484, %v437, 0
        %v845 = vsel %vm484, %v438, 0
        %v848 = vsel %vm484, %v439, 0
        %v851 = vsel %vm484, %v440, 0
        %v854 = vsel %vm484, %v441, 0
        %v857 = vsel %vm484, %v442, 0
        %v860 = vsel %vm484, %v443, 0
        %v863 = vsel %vm484, %v444, 0
        %v866 = vsel %vm484, %v445, 0
        %v869 = vsel %vm484, %v446, 0
        %v872 = vsel %vm484, %v447, 0
        %v875 = vsel %vm521, %v837, 0
        %877 = vmatpush.bf16.msra.mxu0 0
        %878 = vmatpush.bf16.msra.mxu0 0
        %879 = vmatpush.bf16.msra.mxu0 0
        %880 = vmatpush.bf16.msra.mxu0 0
        %881 = vmatpush.bf16.msra.mxu0 0
        %882 = vmatpush.bf16.msra.mxu0 0
        %883 = vmatpush.bf16.msra.mxu0 0
        %884 = vmatpush.bf16.msra.mxu0 %v875
        %885 = vmatmul.bf16.gmra.mxu0 %v839
        %v886 = vpop.f32.mrf.mxu0
        %v887 = vadd.f32 0.0, %v886
        %v888 = vpop.f32.mrf.mxu0
        %v889 = vadd.f32 0.0, %v888
        %890 = vmatmul.bf16.gmra.mxu0 %v842
        %v891 = vpop.f32.mrf.mxu0
        %v892 = vadd.f32 0.0, %v891
        %v893 = vpop.f32.mrf.mxu0
        %v894 = vadd.f32 0.0, %v893
        %895 = vmatmul.bf16.gmra.mxu0 %v845
        %v896 = vpop.f32.mrf.mxu0
        %v897 = vadd.f32 0.0, %v896
        %v898 = vpop.f32.mrf.mxu0
        %v899 = vadd.f32 0.0, %v898
        %900 = vmatmul.bf16.gmra.mxu0 %v848
        %v901 = vpop.f32.mrf.mxu0
        %v902 = vadd.f32 0.0, %v901
        %v903 = vpop.f32.mrf.mxu0
        %v904 = vadd.f32 0.0, %v903
        %905 = vmatmul.bf16.gmra.mxu0 %v851
        %v906 = vpop.f32.mrf.mxu0
        %v907 = vadd.f32 0.0, %v906
        %v908 = vpop.f32.mrf.mxu0
        %v909 = vadd.f32 0.0, %v908
        %910 = vmatmul.bf16.gmra.mxu0 %v854
        %v911 = vpop.f32.mrf.mxu0
        %v912 = vadd.f32 0.0, %v911
        %v913 = vpop.f32.mrf.mxu0
        %v914 = vadd.f32 0.0, %v913
        %915 = vmatmul.bf16.gmra.mxu0 %v857
        %v916 = vpop.f32.mrf.mxu0
        %v917 = vadd.f32 0.0, %v916
        %v918 = vpop.f32.mrf.mxu0
        %v919 = vadd.f32 0.0, %v918
        %920 = vmatmul.bf16.gmra.mxu0 %v860
        %v921 = vpop.f32.mrf.mxu0
        %v922 = vadd.f32 0.0, %v921
        %v923 = vpop.f32.mrf.mxu0
        %v924 = vadd.f32 0.0, %v923
        %925 = vmatmul.bf16.gmra.mxu0 %v863
        %v926 = vpop.f32.mrf.mxu0
        %v927 = vadd.f32 0.0, %v926
        %v928 = vpop.f32.mrf.mxu0
        %v929 = vadd.f32 0.0, %v928
        %930 = vmatmul.bf16.gmra.mxu0 %v866
        %v931 = vpop.f32.mrf.mxu0
        %v932 = vadd.f32 0.0, %v931
        %v933 = vpop.f32.mrf.mxu0
        %v934 = vadd.f32 0.0, %v933
        %935 = vmatmul.bf16.gmra.mxu0 %v869
        %v936 = vpop.f32.mrf.mxu0
        %v937 = vadd.f32 0.0, %v936
        %v938 = vpop.f32.mrf.mxu0
        %v939 = vadd.f32 0.0, %v938
        %940 = vmatmul.bf16.gmra.mxu0 %v872
        %v941 = vpop.f32.mrf.mxu0
        %v942 = vadd.f32 0.0, %v941
        %v943 = vpop.f32.mrf.mxu0
        %v944 = vadd.f32 0.0, %v943
        %945 = vdwg.mxu0
        %v946 = vadd.f32 %v812, %v887
        %v947 = vadd.f32 %v813, %v889
        %v948 = vadd.f32 %v814, %v892
        %v949 = vadd.f32 %v815, %v894
        %v950 = vadd.f32 %v816, %v897
        %v951 = vadd.f32 %v817, %v899
        %v952 = vadd.f32 %v818, %v902
        %v953 = vadd.f32 %v819, %v904
        %v954 = vadd.f32 %v820, %v907
        %v955 = vadd.f32 %v821, %v909
        %v956 = vadd.f32 %v822, %v912
        %v957 = vadd.f32 %v823, %v914
        %v958 = vadd.f32 %v824, %v917
        %v959 = vadd.f32 %v825, %v919
        %v960 = vadd.f32 %v826, %v922
        %v961 = vadd.f32 %v827, %v924
        %v962 = vadd.f32 %v828, %v927
        %v963 = vadd.f32 %v829, %v929
        %v964 = vadd.f32 %v830, %v932
        %v965 = vadd.f32 %v831, %v934
        %v966 = vadd.f32 %v832, %v937
        %v967 = vadd.f32 %v833, %v939
        %v968 = vadd.f32 %v834, %v942
        %v969 = vadd.f32 %v835, %v944
        %s970 = scalar_lea.vmem %s1, 16
        %v971 = vld [vmem:[%s970] sm:$0xf]
        %v973 = vsel %vm484, %v448, 0
        %v976 = vsel %vm484, %v449, 0
        %v979 = vsel %vm484, %v450, 0
        %v982 = vsel %vm484, %v451, 0
        %v985 = vsel %vm484, %v452, 0
        %v988 = vsel %vm484, %v453, 0
        %v991 = vsel %vm484, %v454, 0
        %v994 = vsel %vm484, %v455, 0
        %v997 = vsel %vm484, %v456, 0
        %v1000 = vsel %vm484, %v457, 0
        %v1003 = vsel %vm484, %v458, 0
        %v1006 = vsel %vm484, %v459, 0
        %v1009 = vsel %vm521, %v971, 0
        %1011 = vmatpush.bf16.msra.mxu0 0
        %1012 = vmatpush.bf16.msra.mxu0 0
        %1013 = vmatpush.bf16.msra.mxu0 0
        %1014 = vmatpush.bf16.msra.mxu0 0
        %1015 = vmatpush.bf16.msra.mxu0 0
        %1016 = vmatpush.bf16.msra.mxu0 0
        %1017 = vmatpush.bf16.msra.mxu0 0
        %1018 = vmatpush.bf16.msra.mxu0 %v1009
        %1019 = vmatmul.bf16.gmra.mxu0 %v973
        %v1020 = vpop.f32.mrf.mxu0
        %v1021 = vadd.f32 0.0, %v1020
        %v1022 = vpop.f32.mrf.mxu0
        %v1023 = vadd.f32 0.0, %v1022
        %1024 = vmatmul.bf16.gmra.mxu0 %v976
        %v1025 = vpop.f32.mrf.mxu0
        %v1026 = vadd.f32 0.0, %v1025
        %v1027 = vpop.f32.mrf.mxu0
        %v1028 = vadd.f32 0.0, %v1027
        %1029 = vmatmul.bf16.gmra.mxu0 %v979
        %v1030 = vpop.f32.mrf.mxu0
        %v1031 = vadd.f32 0.0, %v1030
        %v1032 = vpop.f32.mrf.mxu0
        %v1033 = vadd.f32 0.0, %v1032
        %1034 = vmatmul.bf16.gmra.mxu0 %v982
        %v1035 = vpop.f32.mrf.mxu0
        %v1036 = vadd.f32 0.0, %v1035
        %v1037 = vpop.f32.mrf.mxu0
        %v1038 = vadd.f32 0.0, %v1037
        %1039 = vmatmul.bf16.gmra.mxu0 %v985
        %v1040 = vpop.f32.mrf.mxu0
        %v1041 = vadd.f32 0.0, %v1040
        %v1042 = vpop.f32.mrf.mxu0
        %v1043 = vadd.f32 0.0, %v1042
        %1044 = vmatmul.bf16.gmra.mxu0 %v988
        %v1045 = vpop.f32.mrf.mxu0
        %v1046 = vadd.f32 0.0, %v1045
        %v1047 = vpop.f32.mrf.mxu0
        %v1048 = vadd.f32 0.0, %v1047
        %1049 = vmatmul.bf16.gmra.mxu0 %v991
        %v1050 = vpop.f32.mrf.mxu0
        %v1051 = vadd.f32 0.0, %v1050
        %v1052 = vpop.f32.mrf.mxu0
        %v1053 = vadd.f32 0.0, %v1052
        %1054 = vmatmul.bf16.gmra.mxu0 %v994
        %v1055 = vpop.f32.mrf.mxu0
        %v1056 = vadd.f32 0.0, %v1055
        %v1057 = vpop.f32.mrf.mxu0
        %v1058 = vadd.f32 0.0, %v1057
        %1059 = vmatmul.bf16.gmra.mxu0 %v997
        %v1060 = vpop.f32.mrf.mxu0
        %v1061 = vadd.f32 0.0, %v1060
        %v1062 = vpop.f32.mrf.mxu0
        %v1063 = vadd.f32 0.0, %v1062
        %1064 = vmatmul.bf16.gmra.mxu0 %v1000
        %v1065 = vpop.f32.mrf.mxu0
        %v1066 = vadd.f32 0.0, %v1065
        %v1067 = vpop.f32.mrf.mxu0
        %v1068 = vadd.f32 0.0, %v1067
        %1069 = vmatmul.bf16.gmra.mxu0 %v1003
        %v1070 = vpop.f32.mrf.mxu0
        %v1071 = vadd.f32 0.0, %v1070
        %v1072 = vpop.f32.mrf.mxu0
        %v1073 = vadd.f32 0.0, %v1072
        %1074 = vmatmul.bf16.gmra.mxu0 %v1006
        %v1075 = vpop.f32.mrf.mxu0
        %v1076 = vadd.f32 0.0, %v1075
        %v1077 = vpop.f32.mrf.mxu0
        %v1078 = vadd.f32 0.0, %v1077
        %1079 = vdwg.mxu0
        %v1080 = vadd.f32 %v946, %v1021
        %v1081 = vadd.f32 %v947, %v1023
        %v1082 = vadd.f32 %v948, %v1026
        %v1083 = vadd.f32 %v949, %v1028
        %v1084 = vadd.f32 %v950, %v1031
        %v1085 = vadd.f32 %v951, %v1033
        %v1086 = vadd.f32 %v952, %v1036
        %v1087 = vadd.f32 %v953, %v1038
        %v1088 = vadd.f32 %v954, %v1041
        %v1089 = vadd.f32 %v955, %v1043
        %v1090 = vadd.f32 %v956, %v1046
        %v1091 = vadd.f32 %v957, %v1048
        %v1092 = vadd.f32 %v958, %v1051
        %v1093 = vadd.f32 %v959, %v1053
        %v1094 = vadd.f32 %v960, %v1056
        %v1095 = vadd.f32 %v961, %v1058
        %v1096 = vadd.f32 %v962, %v1061
        %v1097 = vadd.f32 %v963, %v1063
        %v1098 = vadd.f32 %v964, %v1066
        %v1099 = vadd.f32 %v965, %v1068
        %v1100 = vadd.f32 %v966, %v1071
        %v1101 = vadd.f32 %v967, %v1073
        %v1102 = vadd.f32 %v968, %v1076
        %v1103 = vadd.f32 %v969, %v1078
        %s1104 = scalar_lea.vmem %s1, 20
        %v1105 = vld [vmem:[%s1104] sm:$0xf]
        %v1107 = vsel %vm484, %v460, 0
        %v1110 = vsel %vm484, %v461, 0
        %v1113 = vsel %vm484, %v462, 0
        %v1116 = vsel %vm484, %v463, 0
        %v1119 = vsel %vm484, %v464, 0
        %v1122 = vsel %vm484, %v465, 0
        %v1125 = vsel %vm484, %v466, 0
        %v1128 = vsel %vm484, %v467, 0
        %v1131 = vsel %vm484, %v468, 0
        %v1134 = vsel %vm484, %v469, 0
        %v1137 = vsel %vm484, %v470, 0
        %v1140 = vsel %vm484, %v471, 0
        %v1143 = vsel %vm521, %v1105, 0
        %1145 = vmatpush.bf16.msra.mxu0 0
        %1146 = vmatpush.bf16.msra.mxu0 0
        %1147 = vmatpush.bf16.msra.mxu0 0
        %1148 = vmatpush.bf16.msra.mxu0 0
        %1149 = vmatpush.bf16.msra.mxu0 0
        %1150 = vmatpush.bf16.msra.mxu0 0
        %1151 = vmatpush.bf16.msra.mxu0 0
        %1152 = vmatpush.bf16.msra.mxu0 %v1143
        %1153 = vmatmul.bf16.gmra.mxu0 %v1107
        %v1154 = vpop.f32.mrf.mxu0
        %v1155 = vadd.f32 0.0, %v1154
        %v1156 = vpop.f32.mrf.mxu0
        %v1157 = vadd.f32 0.0, %v1156
        %1158 = vmatmul.bf16.gmra.mxu0 %v1110
        %v1159 = vpop.f32.mrf.mxu0
        %v1160 = vadd.f32 0.0, %v1159
        %v1161 = vpop.f32.mrf.mxu0
        %v1162 = vadd.f32 0.0, %v1161
        %1163 = vmatmul.bf16.gmra.mxu0 %v1113
        %v1164 = vpop.f32.mrf.mxu0
        %v1165 = vadd.f32 0.0, %v1164
        %v1166 = vpop.f32.mrf.mxu0
        %v1167 = vadd.f32 0.0, %v1166
        %1168 = vmatmul.bf16.gmra.mxu0 %v1116
        %v1169 = vpop.f32.mrf.mxu0
        %v1170 = vadd.f32 0.0, %v1169
        %v1171 = vpop.f32.mrf.mxu0
        %v1172 = vadd.f32 0.0, %v1171
        %1173 = vmatmul.bf16.gmra.mxu0 %v1119
        %v1174 = vpop.f32.mrf.mxu0
        %v1175 = vadd.f32 0.0, %v1174
        %v1176 = vpop.f32.mrf.mxu0
        %v1177 = vadd.f32 0.0, %v1176
        %1178 = vmatmul.bf16.gmra.mxu0 %v1122
        %v1179 = vpop.f32.mrf.mxu0
        %v1180 = vadd.f32 0.0, %v1179
        %v1181 = vpop.f32.mrf.mxu0
        %v1182 = vadd.f32 0.0, %v1181
        %1183 = vmatmul.bf16.gmra.mxu0 %v1125
        %v1184 = vpop.f32.mrf.mxu0
        %v1185 = vadd.f32 0.0, %v1184
        %v1186 = vpop.f32.mrf.mxu0
        %v1187 = vadd.f32 0.0, %v1186
        %1188 = vmatmul.bf16.gmra.mxu0 %v1128
        %v1189 = vpop.f32.mrf.mxu0
        %v1190 = vadd.f32 0.0, %v1189
        %v1191 = vpop.f32.mrf.mxu0
        %v1192 = vadd.f32 0.0, %v1191
        %1193 = vmatmul.bf16.gmra.mxu0 %v1131
        %v1194 = vpop.f32.mrf.mxu0
        %v1195 = vadd.f32 0.0, %v1194
        %v1196 = vpop.f32.mrf.mxu0
        %v1197 = vadd.f32 0.0, %v1196
        %1198 = vmatmul.bf16.gmra.mxu0 %v1134
        %v1199 = vpop.f32.mrf.mxu0
        %v1200 = vadd.f32 0.0, %v1199
        %v1201 = vpop.f32.mrf.mxu0
        %v1202 = vadd.f32 0.0, %v1201
        %1203 = vmatmul.bf16.gmra.mxu0 %v1137
        %v1204 = vpop.f32.mrf.mxu0
        %v1205 = vadd.f32 0.0, %v1204
        %v1206 = vpop.f32.mrf.mxu0
        %v1207 = vadd.f32 0.0, %v1206
        %1208 = vmatmul.bf16.gmra.mxu0 %v1140
        %v1209 = vpop.f32.mrf.mxu0
        %v1210 = vadd.f32 0.0, %v1209
        %v1211 = vpop.f32.mrf.mxu0
        %v1212 = vadd.f32 0.0, %v1211
        %1213 = vdwg.mxu0
        %v1214 = vadd.f32 %v1080, %v1155
        %v1215 = vadd.f32 %v1081, %v1157
        %v1216 = vadd.f32 %v1082, %v1160
        %v1217 = vadd.f32 %v1083, %v1162
        %v1218 = vadd.f32 %v1084, %v1165
        %v1219 = vadd.f32 %v1085, %v1167
        %v1220 = vadd.f32 %v1086, %v1170
        %v1221 = vadd.f32 %v1087, %v1172
        %v1222 = vadd.f32 %v1088, %v1175
        %v1223 = vadd.f32 %v1089, %v1177
        %v1224 = vadd.f32 %v1090, %v1180
        %v1225 = vadd.f32 %v1091, %v1182
        %v1226 = vadd.f32 %v1092, %v1185
        %v1227 = vadd.f32 %v1093, %v1187
        %v1228 = vadd.f32 %v1094, %v1190
        %v1229 = vadd.f32 %v1095, %v1192
        %v1230 = vadd.f32 %v1096, %v1195
        %v1231 = vadd.f32 %v1097, %v1197
        %v1232 = vadd.f32 %v1098, %v1200
        %v1233 = vadd.f32 %v1099, %v1202
        %v1234 = vadd.f32 %v1100, %v1205
        %v1235 = vadd.f32 %v1101, %v1207
        %v1236 = vadd.f32 %v1102, %v1210
        %v1237 = vadd.f32 %v1103, %v1212
        %s1238 = scalar_lea.vmem %s1, 24
        %v1239 = vld [vmem:[%s1238] sm:$0xf]
        %v1241 = vsel %vm484, %v472, 0
        %v1244 = vsel %vm484, %v473, 0
        %v1247 = vsel %vm484, %v474, 0
        %v1250 = vsel %vm521, %v1239, 0
        %1252 = vmatpush.bf16.msra.mxu0 0
        %1253 = vmatpush.bf16.msra.mxu0 0
        %1254 = vmatpush.bf16.msra.mxu0 0
        %1255 = vmatpush.bf16.msra.mxu0 0
        %1256 = vmatpush.bf16.msra.mxu0 0
        %1257 = vmatpush.bf16.msra.mxu0 0
        %1258 = vmatpush.bf16.msra.mxu0 0
        %1259 = vmatpush.bf16.msra.mxu0 %v1250
        %1260 = vmatmul.bf16.gmra.mxu0 %v604
        %v1261 = vpop.f32.mrf.mxu0
        %v1262 = vadd.f32 0.0, %v1261
        %v1263 = vpop.f32.mrf.mxu0
        %v1264 = vadd.f32 0.0, %v1263
        %1265 = vmatmul.bf16.gmra.mxu0 %v607
        %v1266 = vpop.f32.mrf.mxu0
        %v1267 = vadd.f32 0.0, %v1266
        %v1268 = vpop.f32.mrf.mxu0
        %v1269 = vadd.f32 0.0, %v1268
        %1270 = vmatmul.bf16.gmra.mxu0 %v610
        %v1271 = vpop.f32.mrf.mxu0
        %v1272 = vadd.f32 0.0, %v1271
        %v1273 = vpop.f32.mrf.mxu0
        %v1274 = vadd.f32 0.0, %v1273
        %1275 = vmatmul.bf16.gmra.mxu0 %v613
        %v1276 = vpop.f32.mrf.mxu0
        %v1277 = vadd.f32 0.0, %v1276
        %v1278 = vpop.f32.mrf.mxu0
        %v1279 = vadd.f32 0.0, %v1278
        %1280 = vmatmul.bf16.gmra.mxu0 %v616
        %v1281 = vpop.f32.mrf.mxu0
        %v1282 = vadd.f32 0.0, %v1281
        %v1283 = vpop.f32.mrf.mxu0
        %v1284 = vadd.f32 0.0, %v1283
        %1285 = vmatmul.bf16.gmra.mxu0 %v619
        %v1286 = vpop.f32.mrf.mxu0
        %v1287 = vadd.f32 0.0, %v1286
        %v1288 = vpop.f32.mrf.mxu0
        %v1289 = vadd.f32 0.0, %v1288
        %1290 = vmatmul.bf16.gmra.mxu0 %v622
        %v1291 = vpop.f32.mrf.mxu0
        %v1292 = vadd.f32 0.0, %v1291
        %v1293 = vpop.f32.mrf.mxu0
        %v1294 = vadd.f32 0.0, %v1293
        %1295 = vmatmul.bf16.gmra.mxu0 %v625
        %v1296 = vpop.f32.mrf.mxu0
        %v1297 = vadd.f32 0.0, %v1296
        %v1298 = vpop.f32.mrf.mxu0
        %v1299 = vadd.f32 0.0, %v1298
        %1300 = vmatmul.bf16.gmra.mxu0 %v628
        %v1301 = vpop.f32.mrf.mxu0
        %v1302 = vadd.f32 0.0, %v1301
        %v1303 = vpop.f32.mrf.mxu0
        %v1304 = vadd.f32 0.0, %v1303
        %1305 = vmatmul.bf16.gmra.mxu0 %v1241
        %v1306 = vpop.f32.mrf.mxu0
        %v1307 = vadd.f32 0.0, %v1306
        %v1308 = vpop.f32.mrf.mxu0
        %v1309 = vadd.f32 0.0, %v1308
        %1310 = vmatmul.bf16.gmra.mxu0 %v1244
        %v1311 = vpop.f32.mrf.mxu0
        %v1312 = vadd.f32 0.0, %v1311
        %v1313 = vpop.f32.mrf.mxu0
        %v1314 = vadd.f32 0.0, %v1313
        %1315 = vmatmul.bf16.gmra.mxu0 %v1247
        %v1316 = vpop.f32.mrf.mxu0
        %v1317 = vadd.f32 0.0, %v1316
        %v1318 = vpop.f32.mrf.mxu0
        %v1319 = vadd.f32 0.0, %v1318
        %1320 = vdwg.mxu0
        %v1321 = vadd.f32 %v1214, %v1262
        %v1322 = vadd.f32 %v1215, %v1264
        %v1323 = vadd.f32 %v1216, %v1267
        %v1324 = vadd.f32 %v1217, %v1269
        %v1325 = vadd.f32 %v1218, %v1272
        %v1326 = vadd.f32 %v1219, %v1274
        %v1327 = vadd.f32 %v1220, %v1277
        %v1328 = vadd.f32 %v1221, %v1279
        %v1329 = vadd.f32 %v1222, %v1282
        %v1330 = vadd.f32 %v1223, %v1284
        %v1331 = vadd.f32 %v1224, %v1287
        %v1332 = vadd.f32 %v1225, %v1289
        %v1333 = vadd.f32 %v1226, %v1292
        %v1334 = vadd.f32 %v1227, %v1294
        %v1335 = vadd.f32 %v1228, %v1297
        %v1336 = vadd.f32 %v1229, %v1299
        %v1337 = vadd.f32 %v1230, %v1302
        %v1338 = vadd.f32 %v1231, %v1304
        %v1339 = vadd.f32 %v1232, %v1307
        %v1340 = vadd.f32 %v1233, %v1309
        %v1341 = vadd.f32 %v1234, %v1312
        %v1342 = vadd.f32 %v1235, %v1314
        %v1343 = vadd.f32 %v1236, %v1317
        %v1344 = vadd.f32 %v1237, %v1319
        %s1345 = scalar_lea.vmem %s1, 28
        %v1346 = vld [vmem:[%s1345] sm:$0xf]
        %v1348 = vsel %vm484, %v475, 0
        %v1351 = vsel %vm484, %v476, 0
        %v1354 = vsel %vm484, %v477, 0
        %v1357 = vsel %vm521, %v1346, 0
        %1359 = vmatpush.bf16.msra.mxu0 0
        %1360 = vmatpush.bf16.msra.mxu0 0
        %1361 = vmatpush.bf16.msra.mxu0 0
        %1362 = vmatpush.bf16.msra.mxu0 0
        %1363 = vmatpush.bf16.msra.mxu0 0
        %1364 = vmatpush.bf16.msra.mxu0 0
        %1365 = vmatpush.bf16.msra.mxu0 0
        %1366 = vmatpush.bf16.msra.mxu0 %v1357
        %1367 = vmatmul.bf16.gmra.mxu0 %v495
        %v1368 = vpop.f32.mrf.mxu0
        %v1369 = vadd.f32 0.0, %v1368
        %v1370 = vpop.f32.mrf.mxu0
        %v1371 = vadd.f32 0.0, %v1370
        %1372 = vmatmul.bf16.gmra.mxu0 %v498
        %v1373 = vpop.f32.mrf.mxu0
        %v1374 = vadd.f32 0.0, %v1373
        %v1375 = vpop.f32.mrf.mxu0
        %v1376 = vadd.f32 0.0, %v1375
        %1377 = vmatmul.bf16.gmra.mxu0 %v501
        %v1378 = vpop.f32.mrf.mxu0
        %v1379 = vadd.f32 0.0, %v1378
        %v1380 = vpop.f32.mrf.mxu0
        %v1381 = vadd.f32 0.0, %v1380
        %1382 = vmatmul.bf16.gmra.mxu0 %v504
        %v1383 = vpop.f32.mrf.mxu0
        %v1384 = vadd.f32 0.0, %v1383
        %v1385 = vpop.f32.mrf.mxu0
        %v1386 = vadd.f32 0.0, %v1385
        %1387 = vmatmul.bf16.gmra.mxu0 %v507
        %v1388 = vpop.f32.mrf.mxu0
        %v1389 = vadd.f32 0.0, %v1388
        %v1390 = vpop.f32.mrf.mxu0
        %v1391 = vadd.f32 0.0, %v1390
        %1392 = vmatmul.bf16.gmra.mxu0 %v510
        %v1393 = vpop.f32.mrf.mxu0
        %v1394 = vadd.f32 0.0, %v1393
        %v1395 = vpop.f32.mrf.mxu0
        %v1396 = vadd.f32 0.0, %v1395
        %1397 = vmatmul.bf16.gmra.mxu0 %v513
        %v1398 = vpop.f32.mrf.mxu0
        %v1399 = vadd.f32 0.0, %v1398
        %v1400 = vpop.f32.mrf.mxu0
        %v1401 = vadd.f32 0.0, %v1400
        %1402 = vmatmul.bf16.gmra.mxu0 %v516
        %v1403 = vpop.f32.mrf.mxu0
        %v1404 = vadd.f32 0.0, %v1403
        %v1405 = vpop.f32.mrf.mxu0
        %v1406 = vadd.f32 0.0, %v1405
        %1407 = vmatmul.bf16.gmra.mxu0 %v519
        %v1408 = vpop.f32.mrf.mxu0
        %v1409 = vadd.f32 0.0, %v1408
        %v1410 = vpop.f32.mrf.mxu0
        %v1411 = vadd.f32 0.0, %v1410
        %1412 = vmatmul.bf16.gmra.mxu0 %v1348
        %v1413 = vpop.f32.mrf.mxu0
        %v1414 = vadd.f32 0.0, %v1413
        %v1415 = vpop.f32.mrf.mxu0
        %v1416 = vadd.f32 0.0, %v1415
        %1417 = vmatmul.bf16.gmra.mxu0 %v1351
        %v1418 = vpop.f32.mrf.mxu0
        %v1419 = vadd.f32 0.0, %v1418
        %v1420 = vpop.f32.mrf.mxu0
        %v1421 = vadd.f32 0.0, %v1420
        %1422 = vmatmul.bf16.gmra.mxu0 %v1354
        %v1423 = vpop.f32.mrf.mxu0
        %v1424 = vadd.f32 0.0, %v1423
        %v1425 = vpop.f32.mrf.mxu0
        %v1426 = vadd.f32 0.0, %v1425
        %1427 = vdwg.mxu0
        %v1428 = vadd.f32 %v1321, %v1369
        %v1429 = vadd.f32 %v1322, %v1371
        %v1430 = vadd.f32 %v1323, %v1374
        %v1431 = vadd.f32 %v1324, %v1376
        %v1432 = vadd.f32 %v1325, %v1379
        %v1433 = vadd.f32 %v1326, %v1381
        %v1434 = vadd.f32 %v1327, %v1384
        %v1435 = vadd.f32 %v1328, %v1386
        %v1436 = vadd.f32 %v1329, %v1389
        %v1437 = vadd.f32 %v1330, %v1391
        %v1438 = vadd.f32 %v1331, %v1394
        %v1439 = vadd.f32 %v1332, %v1396
        %v1440 = vadd.f32 %v1333, %v1399
        %v1441 = vadd.f32 %v1334, %v1401
        %v1442 = vadd.f32 %v1335, %v1404
        %v1443 = vadd.f32 %v1336, %v1406
        %v1444 = vadd.f32 %v1337, %v1409
        %v1445 = vadd.f32 %v1338, %v1411
        %v1446 = vadd.f32 %v1339, %v1414
        %v1447 = vadd.f32 %v1340, %v1416
        %v1448 = vadd.f32 %v1341, %v1419
        %v1449 = vadd.f32 %v1342, %v1421
        %v1450 = vadd.f32 %v1343, %v1424
        %v1451 = vadd.f32 %v1344, %v1426
        %s1452 = scalar_lea.vmem %s1, 32
        %v1453 = vld [vmem:[%s1452] sm:$0xf]
        %v1455 = vsel %vm484, %v478, 0
        %v1458 = vsel %vm484, %v479, 0
        %v1461 = vsel %vm484, %v480, 0
        %v1464 = vsel %vm521, %v1453, 0
        %1466 = vmatpush.bf16.msra.mxu0 0
        %1467 = vmatpush.bf16.msra.mxu0 0
        %1468 = vmatpush.bf16.msra.mxu0 0
        %1469 = vmatpush.bf16.msra.mxu0 0
        %1470 = vmatpush.bf16.msra.mxu0 0
        %1471 = vmatpush.bf16.msra.mxu0 0
        %1472 = vmatpush.bf16.msra.mxu0 0
        %1473 = vmatpush.bf16.msra.mxu0 %v1464
        %1474 = vmatmul.bf16.gmra.mxu0 %v714
        %v1475 = vpop.f32.mrf.mxu0
        %v1476 = vadd.f32 0.0, %v1475
        %v1477 = vpop.f32.mrf.mxu0
        %v1478 = vadd.f32 0.0, %v1477
        %1479 = vmatmul.bf16.gmra.mxu0 %v717
        %v1480 = vpop.f32.mrf.mxu0
        %v1481 = vadd.f32 0.0, %v1480
        %v1482 = vpop.f32.mrf.mxu0
        %v1483 = vadd.f32 0.0, %v1482
        %1484 = vmatmul.bf16.gmra.mxu0 %v720
        %v1485 = vpop.f32.mrf.mxu0
        %v1486 = vadd.f32 0.0, %v1485
        %v1487 = vpop.f32.mrf.mxu0
        %v1488 = vadd.f32 0.0, %v1487
        %1489 = vmatmul.bf16.gmra.mxu0 %v723
        %v1490 = vpop.f32.mrf.mxu0
        %v1491 = vadd.f32 0.0, %v1490
        %v1492 = vpop.f32.mrf.mxu0
        %v1493 = vadd.f32 0.0, %v1492
        %1494 = vmatmul.bf16.gmra.mxu0 %v726
        %v1495 = vpop.f32.mrf.mxu0
        %v1496 = vadd.f32 0.0, %v1495
        %v1497 = vpop.f32.mrf.mxu0
        %v1498 = vadd.f32 0.0, %v1497
        %1499 = vmatmul.bf16.gmra.mxu0 %v729
        %v1500 = vpop.f32.mrf.mxu0
        %v1501 = vadd.f32 0.0, %v1500
        %v1502 = vpop.f32.mrf.mxu0
        %v1503 = vadd.f32 0.0, %v1502
        %1504 = vmatmul.bf16.gmra.mxu0 %v732
        %v1505 = vpop.f32.mrf.mxu0
        %v1506 = vadd.f32 0.0, %v1505
        %v1507 = vpop.f32.mrf.mxu0
        %v1508 = vadd.f32 0.0, %v1507
        %1509 = vmatmul.bf16.gmra.mxu0 %v735
        %v1510 = vpop.f32.mrf.mxu0
        %v1511 = vadd.f32 0.0, %v1510
        %v1512 = vpop.f32.mrf.mxu0
        %v1513 = vadd.f32 0.0, %v1512
        %1514 = vmatmul.bf16.gmra.mxu0 %v738
        %v1515 = vpop.f32.mrf.mxu0
        %v1516 = vadd.f32 0.0, %v1515
        %v1517 = vpop.f32.mrf.mxu0
        %v1518 = vadd.f32 0.0, %v1517
        %1519 = vmatmul.bf16.gmra.mxu0 %v1455
        %v1520 = vpop.f32.mrf.mxu0
        %v1521 = vadd.f32 0.0, %v1520
        %v1522 = vpop.f32.mrf.mxu0
        %v1523 = vadd.f32 0.0, %v1522
        %1524 = vmatmul.bf16.gmra.mxu0 %v1458
        %v1525 = vpop.f32.mrf.mxu0
        %v1526 = vadd.f32 0.0, %v1525
        %v1527 = vpop.f32.mrf.mxu0
        %v1528 = vadd.f32 0.0, %v1527
        %1529 = vmatmul.bf16.gmra.mxu0 %v1461
        %v1530 = vpop.f32.mrf.mxu0
        %v1531 = vadd.f32 0.0, %v1530
        %v1532 = vpop.f32.mrf.mxu0
        %v1533 = vadd.f32 0.0, %v1532
        %1534 = vdwg.mxu0
        %v1535 = vadd.f32 %v1428, %v1476
        %v1536 = vadd.f32 %v1429, %v1478
        %v1537 = vadd.f32 %v1430, %v1481
        %v1538 = vadd.f32 %v1431, %v1483
        %v1539 = vadd.f32 %v1432, %v1486
        %v1540 = vadd.f32 %v1433, %v1488
        %v1541 = vadd.f32 %v1434, %v1491
        %v1542 = vadd.f32 %v1435, %v1493
        %v1543 = vadd.f32 %v1436, %v1496
        %v1544 = vadd.f32 %v1437, %v1498
        %v1545 = vadd.f32 %v1438, %v1501
        %v1546 = vadd.f32 %v1439, %v1503
        %v1547 = vadd.f32 %v1440, %v1506
        %v1548 = vadd.f32 %v1441, %v1508
        %v1549 = vadd.f32 %v1442, %v1511
        %v1550 = vadd.f32 %v1443, %v1513
        %v1551 = vadd.f32 %v1444, %v1516
        %v1552 = vadd.f32 %v1445, %v1518
        %v1553 = vadd.f32 %v1446, %v1521
        %v1554 = vadd.f32 %v1447, %v1523
        %v1555 = vadd.f32 %v1448, %v1526
        %v1556 = vadd.f32 %v1449, %v1528
        %v1557 = vadd.f32 %v1450, %v1531
        %v1558 = vadd.f32 %v1451, %v1533
        %v1559 = vld [vmem:[%s2] sm:$0x1]
        %v1561 = vperm.slane %v1559, 0
        %v1563 = vmul.f32 %v1535, %v1561
        %v1564 = vmul.f32 %v1536, %v1561
        %v1565 = vmul.f32 %v1537, %v1561
        %v1566 = vmul.f32 %v1538, %v1561
        %v1567 = vmul.f32 %v1539, %v1561
        %v1568 = vmul.f32 %v1540, %v1561
        %v1569 = vmul.f32 %v1541, %v1561
        %v1570 = vmul.f32 %v1542, %v1561
        %v1571 = vmul.f32 %v1543, %v1561
        %v1572 = vmul.f32 %v1544, %v1561
        %v1573 = vmul.f32 %v1545, %v1561
        %v1574 = vmul.f32 %v1546, %v1561
        %v1575 = vmul.f32 %v1547, %v1561
        %v1576 = vmul.f32 %v1548, %v1561
        %v1577 = vmul.f32 %v1549, %v1561
        %v1578 = vmul.f32 %v1550, %v1561
        %v1579 = vmul.f32 %v1551, %v1561
        %v1580 = vmul.f32 %v1552, %v1561
        %v1581 = vmul.f32 %v1553, %v1561
        %v1582 = vmul.f32 %v1554, %v1561
        %v1583 = vmul.f32 %v1555, %v1561
        %v1584 = vmul.f32 %v1556, %v1561
        %v1585 = vmul.f32 %v1557, %v1561
        %v1586 = vmul.f32 %v1558, %v1561
        %v1587 = vld [vmem:[%s3] sm:$0x1]
        %v1589 = vperm.slane %v1587, 0
        %v1591 = vadd.f32 %v1563, %v1589
        %v1592 = vadd.f32 %v1564, %v1589
        %v1593 = vadd.f32 %v1565, %v1589
        %v1594 = vadd.f32 %v1566, %v1589
        %v1595 = vadd.f32 %v1567, %v1589
        %v1596 = vadd.f32 %v1568, %v1589
        %v1597 = vadd.f32 %v1569, %v1589
        %v1598 = vadd.f32 %v1570, %v1589
        %v1599 = vadd.f32 %v1571, %v1589
        %v1600 = vadd.f32 %v1572, %v1589
        %v1601 = vadd.f32 %v1573, %v1589
        %v1602 = vadd.f32 %v1574, %v1589
        %v1603 = vadd.f32 %v1575, %v1589
        %v1604 = vadd.f32 %v1576, %v1589
        %v1605 = vadd.f32 %v1577, %v1589
        %v1606 = vadd.f32 %v1578, %v1589
        %v1607 = vadd.f32 %v1579, %v1589
        %v1608 = vadd.f32 %v1580, %v1589
        %v1609 = vadd.f32 %v1581, %v1589
        %v1610 = vadd.f32 %v1582, %v1589
        %v1611 = vadd.f32 %v1583, %v1589
        %v1612 = vadd.f32 %v1584, %v1589
        %v1613 = vadd.f32 %v1585, %v1589
        %v1614 = vadd.f32 %v1586, %v1589
        %v1615 = vmax.f32 %v1591, 0.0
        %v1616 = vmax.f32 %v1592, 0.0
        %v1617 = vmax.f32 %v1593, 0.0
        %v1618 = vmax.f32 %v1594, 0.0
        %v1619 = vmax.f32 %v1595, 0.0
        %v1620 = vmax.f32 %v1596, 0.0
        %v1621 = vmax.f32 %v1597, 0.0
        %v1622 = vmax.f32 %v1598, 0.0
        %v1623 = vmax.f32 %v1599, 0.0
        %v1624 = vmax.f32 %v1600, 0.0
        %v1625 = vmax.f32 %v1601, 0.0
        %v1626 = vmax.f32 %v1602, 0.0
        %v1627 = vmax.f32 %v1603, 0.0
        %v1628 = vmax.f32 %v1604, 0.0
        %v1629 = vmax.f32 %v1605, 0.0
        %v1630 = vmax.f32 %v1606, 0.0
        %v1631 = vmax.f32 %v1607, 0.0
        %v1632 = vmax.f32 %v1608, 0.0
        %v1633 = vmax.f32 %v1609, 0.0
        %v1634 = vmax.f32 %v1610, 0.0
        %v1635 = vmax.f32 %v1611, 0.0
        %v1636 = vmax.f32 %v1612, 0.0
        %v1637 = vmax.f32 %v1613, 0.0
        %v1638 = vmax.f32 %v1614, 0.0
        %v1639 = vrot.slane %v1615, 1
        %v1640 = vrot.slane %v1616, 1
        %v1641 = vrot.slane %v1617, 1
        %v1642 = vrot.slane %v1618, 1
        %v1643 = vrot.slane %v1619, 1
        %v1644 = vrot.slane %v1620, 1
        %v1645 = vrot.slane %v1621, 1
        %v1646 = vrot.slane %v1622, 1
        %v1647 = vrot.slane %v1623, 1
        %v1648 = vrot.slane %v1624, 1
        %v1649 = vrot.slane %v1625, 1
        %v1650 = vrot.slane %v1626, 1
        %v1651 = vrot.slane %v1627, 1
        %v1652 = vrot.slane %v1628, 1
        %v1653 = vrot.slane %v1629, 1
        %v1654 = vrot.slane %v1630, 1
        %v1655 = vrot.slane %v1631, 1
        %v1656 = vrot.slane %v1632, 1
        %v1657 = vrot.slane %v1633, 1
        %v1658 = vrot.slane %v1634, 1
        %v1659 = vrot.slane %v1635, 1
        %v1660 = vrot.slane %v1636, 1
        %v1661 = vrot.slane %v1637, 1
        %v1662 = vrot.slane %v1638, 1
        %v1663 = vsel %vm308, %v1661, %v1662
        %v1664 = vsel %vm308, %v1660, %v1661
        %v1665 = vsel %vm308, %v1658, %v1659
        %v1666 = vsel %vm308, %v1657, %v1658
        %v1667 = vsel %vm308, %v1655, %v1656
        %v1668 = vsel %vm308, %v1654, %v1655
        %v1669 = vsel %vm308, %v1652, %v1653
        %v1670 = vsel %vm308, %v1651, %v1652
        %v1671 = vsel %vm308, %v1649, %v1650
        %v1672 = vsel %vm308, %v1648, %v1649
        %v1673 = vsel %vm308, %v1646, %v1647
        %v1674 = vsel %vm308, %v1645, %v1646
        %v1675 = vsel %vm308, %v1643, %v1644
        %v1676 = vsel %vm308, %v1642, %v1643
        %v1677 = vsel %vm308, %v1640, %v1641
        %v1678 = vsel %vm308, %v1639, %v1640
        %v1679 = vmax.f32 %v1615, %v1678
        %v1680 = vmax.f32 %v1616, %v1677
        %v1681 = vmax.f32 %v1618, %v1676
        %v1682 = vmax.f32 %v1619, %v1675
        %v1683 = vmax.f32 %v1621, %v1674
        %v1684 = vmax.f32 %v1622, %v1673
        %v1685 = vmax.f32 %v1624, %v1672
        %v1686 = vmax.f32 %v1625, %v1671
        %v1687 = vmax.f32 %v1627, %v1670
        %v1688 = vmax.f32 %v1628, %v1669
        %v1689 = vmax.f32 %v1630, %v1668
        %v1690 = vmax.f32 %v1631, %v1667
        %v1691 = vmax.f32 %v1633, %v1666
        %v1692 = vmax.f32 %v1634, %v1665
        %v1693 = vmax.f32 %v1636, %v1664
        %v1694 = vmax.f32 %v1637, %v1663
        %v1695 = vmax.f32 %v1679, %v1681
        %v1696 = vmax.f32 %v1680, %v1682
        %v1697 = vmax.f32 %v1683, %v1685
        %v1698 = vmax.f32 %v1684, %v1686
        %v1699 = vmax.f32 %v1687, %v1689
        %v1700 = vmax.f32 %v1688, %v1690
        %v1701 = vmax.f32 %v1691, %v1693
        %v1702 = vmax.f32 %v1692, %v1694
        %1703 = vst [vmem:[%s204] sm:$0xff] %v1695
        %1704 = vst [vmem:[%s204 + $0x8] sm:$0xff] %v1696
        %1705 = vst [vmem:[%s204 + $0x10] sm:$0xff] %v1697
        %1706 = vst [vmem:[%s204 + $0x18] sm:$0xff] %v1698
        %1707 = vst [vmem:[%s204 + $0x20] sm:$0xff] %v1699
        %1708 = vst [vmem:[%s204 + $0x28] sm:$0xff] %v1700
        %1709 = vst [vmem:[%s204 + $0x30] sm:$0xff] %v1701
        %1710 = vst [vmem:[%s204 + $0x38] sm:$0xff] %v1702
        %s1711 = sand.u32 %s129, 1
        %s1712 = scalar_lea.sflag [#allocation3], %s1711
        %s1713 = sand.u32 %s129, 1
        %s1714 = smul.addr %s1713, 64
        %s1715 = scalar_lea.vmem [#allocation2], %s1714
        // Predicated region
        $region37: #{tpu_custom_call.1} parent=35 // pred_check
          %p1716 = pneg %p139
        $region38: #{tpu_custom_call.1} parent=35 // pred_check_branch
          %1718 = sbr.rel (%p1716) target = $region40
        $region39: #{tpu_custom_call.1} parent=35 // pred_region
          %s1719 = smul.u32 4, %s23
          %1721 = vsyncadd %s1712, 0
          %s1722 = smul.addr %s1719, 2
          %s1723 = smul.addr %s22, 16
          %s1724 = sadd.s32 %s1722, %s1723
          %s1725 = smul.addr %s1724, 8
          %s1726 = scalar_lea.hbm %s4, %s1725
          %s1727 = sshll.u32 %s1715, 4
          %s1728 = int_to_ptr.vmem [resolvable:$true] %s1727
          %s1729 = sshll.u32 %s1726, 4
          %s1730 = int_to_ptr.hbm [resolvable:$true] %s1729
          %1735 = dma.vmem_to_hbm [thread:$0]  %s1728, 1024, %s1730, %s1712, 128, 128, 8
        $region40: #{tpu_custom_call.1} parent=35 // pred_fallthru
          _
      $region36: #{tpu_custom_call.1} parent=5 // pred_fallthru
        _
      %p1736 = scmp.le.s32.totalorder 2, %s13
      // Predicated region
      $region41: #{tpu_custom_call.1} parent=5 // pred_check
        %p1737 = pneg %p1736
      $region42: #{tpu_custom_call.1} parent=5 // pred_check_branch
        %1739 = sbr.rel (%p1737) target = $region44
      $region43: #{tpu_custom_call.1} parent=5 // pred_region
        %s1740 = ssub.s32 %s13, 2
        // Predicated region
        $region45: #{tpu_custom_call.1} parent=43 // pred_check
          %p1741 = pneg %p145
        $region46: #{tpu_custom_call.1} parent=43 // pred_check_branch
          %1743 = sbr.rel (%p1741) target = $region48
        $region47: #{tpu_custom_call.1} parent=43 // pred_region
          %s1744 = sand.u32 %s130, 1
          %s1745 = scalar_lea.sflag [#allocation3], %s1744
          %s1746 = sand.u32 %s130, 1
          %s1747 = smul.addr %s1746, 64
          %s1748 = scalar_lea.vmem [#allocation2], %s1747
          %1750 = dma.done %s1745, 1024
        $region48: #{tpu_custom_call.1} parent=43 // pred_fallthru
          _
      $region44: #{tpu_custom_call.1} parent=5 // pred_fallthru
        _
    $region6: #{tpu_custom_call.1} parent=1 // loop_footer
      %s17 = sadd.s32 1, %s13
    $region7: #{tpu_custom_call.1} parent=1 // loop_footer_branch
      %12 = sbr.rel target = $region3
    $region8: #{tpu_custom_call.1} parent=1 // loop_exit
      _
    %1751 = vsyncpa [#allocation3], 1
    %s1752 = scalar_lea.sflag [#allocation3], 1
    %1753 = vsyncpa %s1752, 1

</llo_original>
